<compile_context>
chip_gen: v6e
topology: v6e:2x2x1
jax: 0.10.0
libtpu: 0.0.40
codegen_flags: <defaults>
</compile_context>

<pallas_src>
import functools

import jax
import jax.numpy as jnp
from jax.experimental import pallas as pl
from jax.experimental.pallas import tpu as pltpu

EPS = 1e-5          # nn.BatchNorm1d default eps
NEG_SLOPE = 0.01    # nn.LeakyReLU default negative_slope
HIDDEN = 512
TILE_T_MAX = 1024   # Row tile.  Measured HBM-roofline plateaus around 512-1024
                    # rows; with bf16 h1 a 1024-row tile stays well inside the
                    # 32 MiB scoped-VMEM default (and v7x's 64 MiB physical
                    # VMEM), so do not chase larger tiles.


def _round_up(x, m):
    return (x + m - 1) // m * m


def _leaky_relu(x):
    # Valid for 0 < NEG_SLOPE < 1; avoids an explicit compare+select.
    return jnp.maximum(x, NEG_SLOPE * x)


def _row_mask(i, tile_t, n_valid):
    # 1.0 for rows belonging to the real batch, 0.0 for padding rows.
    row = i * tile_t + jax.lax.broadcasted_iota(jnp.int32, (tile_t, 1), 0)
    return (row < n_valid).astype(jnp.float32)


# ------------------------------ kernels -----------------------------------

def _bn2_stats_kernel(h1_ref, sc1_ref, sh1_ref, w2_ref, s_ref, ss_ref,
                      *, n_valid, need_mask):
    """BN1 (folded scale/shift) + LeakyReLU + bf16 (tile_t,512)@(512,512);
    emits per-tile sum / sum-of-squares of the bias-free layer-2
    pre-activations (b2 is absorbed exactly by BatchNorm)."""
    x1 = h1_ref[...].astype(jnp.float32) * sc1_ref[...] + sh1_ref[...]
    a1 = _leaky_relu(x1)
    hc = jnp.dot(a1.astype(jnp.bfloat16), w2_ref[...],
                 preferred_element_type=jnp.float32)

    def emit(hm):
        s_ref[0] = jnp.sum(hm, axis=0, keepdims=True)
        ss_ref[0] = jnp.sum(hm * hc, axis=0, keepdims=True)

    if need_mask:
        i = pl.program_id(0)
        is_last = i == pl.num_programs(0) - 1

        @pl.when(jnp.logical_not(is_last))
        def _():
            emit(hc)                                      # interior tiles: no mask

        @pl.when(is_last)
        def _():
            emit(hc * _row_mask(i, hc.shape[0], n_valid))  # mask padding rows
    else:
        emit(hc)


def _tail_kernel(h1_ref, sc1_ref, sh1_ref, w2_ref, sc2_ref, sh2_ref,
                 w3_ref, b3_ref, y_ref):
    """Recompute the layer-2 matmul (cheaper than an h2 HBM round trip on
    v6e/v7x), apply BN2 + LeakyReLU, do the 512->1 layer on the MXU producing
    a lane-dense (1, tile_t) output block, then sigmoid."""
    x1 = h1_ref[...].astype(jnp.float32) * sc1_ref[...] + sh1_ref[...]
    a1 = _leaky_relu(x1)
    hc = jnp.dot(a1.astype(jnp.bfloat16), w2_ref[...],
                 preferred_element_type=jnp.float32)
    a2 = _leaky_relu(hc * sc2_ref[...] + sh2_ref[...])
    # (1,512) x (tile_t,512) contracting the 512 axis -> (1, tile_t), lane-dense.
    logits = jax.lax.dot_general(
        w3_ref[...], a2, (((1,), (1,)), ((), ())),
        preferred_element_type=jnp.float32) + b3_ref[...]
    y_ref[...] = jax.nn.sigmoid(logits)


# ------------------------------ parameters --------------------------------

def init_params(key, box_dim, rel_dim, obj_dim):
    """Deterministic init matching the PyTorch module's shapes.
    Linear weights: kaiming_normal_; biases: PyTorch default uniform;
    BatchNorm gamma=1, beta=0."""
    in_size = box_dim * 2 + rel_dim + obj_dim * 2
    k1, k2, k3, kb1, kb2, kb3 = jax.random.split(key, 6)

    def kaiming(k, fan_in, fan_out):
        std = (2.0 / fan_in) ** 0.5
        return jax.random.normal(k, (fan_in, fan_out), jnp.float32) * std

    def lin_bias(k, fan_in, fan_out):
        bound = 1.0 / (fan_in ** 0.5)
        return jax.random.uniform(k, (1, fan_out), jnp.float32, -bound, bound)

    w1, b1 = kaiming(k1, in_size, HIDDEN), lin_bias(kb1, in_size, HIDDEN)
    w2, b2 = kaiming(k2, HIDDEN, HIDDEN), lin_bias(kb2, HIDDEN, HIDDEN)
    w3, b3 = kaiming(k3, HIDDEN, 1), lin_bias(kb3, HIDDEN, 1)
    g1, be1 = jnp.ones((1, HIDDEN), jnp.float32), jnp.zeros((1, HIDDEN), jnp.float32)
    g2, be2 = jnp.ones((1, HIDDEN), jnp.float32), jnp.zeros((1, HIDDEN), jnp.float32)
    return (w1, b1, g1, be1, w2, b2, g2, be2, w3, b3)


# ------------------------------ forward ------------------------------------

def box_discriminator_forward(params, objs, triples, boxes, rel_dim, obj_dim):
    """Equivalent of BoxDiscriminator.forward(objs, triples, boxes)."""
    (w1, b1, g1, be1, w2, b2, g2, be2, w3, b3) = params
    f32 = jnp.float32

    t = triples.shape[0]
    if t == 0:  # avoid BN divide-by-zero on an empty batch
        return jnp.zeros((0, 1), f32), None

    # ---- XLA glue: layer 1.  One-hot @ W1 over class/predicate columns is a
    # sum of three gathered W1 rows; only 8 box columns need a dense matmul. ----
    s_idx, predicates, o_idx = triples[:, 0], triples[:, 1], triples[:, 2]
    subject_box = boxes[s_idx].astype(f32)
    object_box = boxes[o_idx].astype(f32)
    n_cls_rows = 2 * obj_dim + rel_dim
    w1_cls = w1[:n_cls_rows]
    w1_box = w1[n_cls_rows:]
    emb = (jnp.take(w1_cls, objs[s_idx], axis=0)
           + jnp.take(w1_cls, obj_dim + objs[o_idx], axis=0)
           + jnp.take(w1_cls, 2 * obj_dim + predicates, axis=0))   # (T, 512)
    boxf = jnp.concatenate([subject_box, object_box], axis=1)       # (T, 8)
    h1 = emb + boxf @ w1_box + b1                                   # (T, 512) f32

    # BN1 batch statistics (biased var) in f32, numerically safe two-pass form,
    # folded into a single per-feature scale/shift FMA.
    mu1 = jnp.mean(h1, axis=0, keepdims=True)
    var1 = jnp.mean(jnp.square(h1 - mu1), axis=0, keepdims=True)
    scale1 = g1 * jax.lax.rsqrt(var1 + EPS)
    shift1 = be1 - mu1 * scale1

    # ---- tiling: T padded to a multiple of the (8-sublane aligned) row tile ----
    tile_t = min(TILE_T_MAX, _round_up(t, 8))
    t_pad = _round_up(t, tile_t)
    nt = t_pad // tile_t
    pad = t_pad - t
    h1_bf = jnp.pad(h1, ((0, pad), (0, 0))).astype(jnp.bfloat16)    # bf16 HBM

    w2_bf = w2.astype(jnp.bfloat16)       # 0.5 MiB, VMEM-resident in both passes
    w3_row = w3.T.astype(f32)             # (1, 512)

    row_spec = pl.BlockSpec((tile_t, HIDDEN), lambda i: (i, 0))
    vec_spec = pl.BlockSpec((1, HIDDEN), lambda i: (0, 0))
    mat_spec = pl.BlockSpec((HIDDEN, HIDDEN), lambda i: (0, 0))
    stat_spec = pl.BlockSpec((1, 1, HIDDEN), lambda i: (i, 0, 0))
    par = pltpu.CompilerParams(dimension_semantics=("parallel",))

    # ---- pass 1 (Pallas): per-tile BN2 statistics (no h2 materialization) ----
    s2p, ss2p = pl.pallas_call(
        functools.partial(_bn2_stats_kernel, n_valid=t, need_mask=pad > 0),
        grid=(nt,),
        in_specs=[row_spec, vec_spec, vec_spec, mat_spec],
        out_specs=[stat_spec, stat_spec],
        out_shape=(jax.ShapeDtypeStruct((nt, 1, HIDDEN), f32),
                   jax.ShapeDtypeStruct((nt, 1, HIDDEN), f32)),
        compiler_params=par,
    )(h1_bf, scale1, shift1, w2_bf)

    # Fold BN2.  b2 is a per-feature constant, so BatchNorm's mean subtraction
    # absorbs it exactly: mu2 = mean(hc) + b2, var2 = var(hc), and the folded
    # affine is hc*scale2 + (be2 - mean(hc)*scale2) -- b2 never appears.
    n = jnp.asarray(t, f32)
    mu_hc = jnp.sum(s2p, axis=0) / n                                 # (1, 512)
    var2 = jnp.maximum(jnp.sum(ss2p, axis=0) / n - mu_hc * mu_hc, 0.0)
    # TODO(synk): E[x^2]-E[x]^2 can catastrophically cancel if |mean| >> std;
    # switch to a Welford / two-pass variant if that regime appears.
    scale2 = g2 * jax.lax.rsqrt(var2 + EPS)
    shift2 = be2 - mu_hc * scale2

    # ---- pass 2 (Pallas): BN1+lrelu, recomputed bf16 matmul, BN2+lrelu,
    #      512->1 on the MXU, sigmoid; lane-dense (1, tile_t) output blocks ----
    y_row = pl.pallas_call(
        _tail_kernel,
        grid=(nt,),
        in_specs=[row_spec, vec_spec, vec_spec, mat_spec,
                  vec_spec, vec_spec, vec_spec,
                  pl.BlockSpec((1, 1), lambda i: (0, 0))],
        out_specs=pl.BlockSpec((1, tile_t), lambda i: (0, i)),
        out_shape=jax.ShapeDtypeStruct((1, t_pad), f32),
        compiler_params=par,
    )(h1_bf, scale1, shift1, w2_bf, scale2, shift2, w3_row, b3)

    y = y_row[0, :t].reshape(t, 1)

    # TODO(synk): discriminator_regularizer (with_grad=True) needs gradients of
    # the logits w.r.t. the assembled one-hot input; not implemented.
    # TODO(synk): BatchNorm running_mean/running_var momentum updates (PyTorch
    # train-mode side effect) are not emitted.
    reg = None
    return y, reg


# ------------------------- pure-JAX reference (f32) ------------------------

def _reference_forward(params, objs, triples, boxes, rel_dim, obj_dim):
    (w1, b1, g1, be1, w2, b2, g2, be2, w3, b3) = params
    s_idx, predicates, o_idx = triples[:, 0], triples[:, 1], triples[:, 2]
    x = jnp.concatenate(
        [jax.nn.one_hot(objs[s_idx], obj_dim, dtype=jnp.float32),
         jax.nn.one_hot(objs[o_idx], obj_dim, dtype=jnp.float32),
         jax.nn.one_hot(predicates, rel_dim, dtype=jnp.float32),
         boxes[s_idx], boxes[o_idx]], axis=1).astype(jnp.float32)

    def bn_lrelu(h, g, be):
        mu = jnp.mean(h, axis=0, keepdims=True)
        var = jnp.mean((h - mu) ** 2, axis=0, keepdims=True)
        h = (h - mu) * jax.lax.rsqrt(var + EPS) * g + be
        return jnp.where(h >= 0, h, NEG_SLOPE * h)

    h = bn_lrelu(x @ w1 + b1, g1, be1)
    h = bn_lrelu(h @ w2 + b2, g2, be2)
    return jax.nn.sigmoid(h @ w3 + b3)


if __name__ == "__main__":
    BOX_DIM, REL_DIM, OBJ_DIM = 4, 8, 16
    N_OBJS, N_TRIPLES = 10, 8

    key = jax.random.PRNGKey(0)
    kp, ko, ks, kr, kt, kb = jax.random.split(key, 6)

    params = init_params(kp, BOX_DIM, REL_DIM, OBJ_DIM)

    objs = jax.random.randint(ko, (N_OBJS,), 0, OBJ_DIM, dtype=jnp.int32)
    s_idx = jax.random.randint(ks, (N_TRIPLES, 1), 0, N_OBJS, dtype=jnp.int32)
    preds = jax.random.randint(kr, (N_TRIPLES, 1), 0, REL_DIM, dtype=jnp.int32)
    o_idx = jax.random.randint(kt, (N_TRIPLES, 1), 0, N_OBJS, dtype=jnp.int32)
    triples = jnp.concatenate([s_idx, preds, o_idx], axis=1)          # (T, 3)
    boxes = jax.random.uniform(kb, (N_OBJS, BOX_DIM), jnp.float32)    # (N, 4)

    fwd = jax.jit(box_discriminator_forward, static_argnums=(4, 5))
    y, reg = fwd(params, objs, triples, boxes, REL_DIM, OBJ_DIM)
    y = jax.block_until_ready(y)
    assert y.shape == (N_TRIPLES, 1)
    assert reg is None

    y_ref = _reference_forward(params, objs, triples, boxes, REL_DIM, OBJ_DIM)
    max_err = float(jnp.max(jnp.abs(y - y_ref)))
    assert max_err < 6e-2, f"max abs err vs f32 reference: {max_err}"
    print("KERNEL_OK")
</pallas_src>

<mosaic_0001>
module attributes {stable_mosaic.version = 11 : i64} {
  func.func @_bn2_stats_kernel(%arg0: i32, %arg1: memref<8x512xbf16, #tpu.memory_space<vmem>>, %arg2: memref<1x512xf32, #tpu.memory_space<vmem>>, %arg3: memref<1x512xf32, #tpu.memory_space<vmem>>, %arg4: memref<512x512xbf16, #tpu.memory_space<vmem>>, %arg5: memref<1x1x512xf32, #tpu.memory_space<vmem>>, %arg6: memref<1x1x512xf32, #tpu.memory_space<vmem>>) attributes {dimension_semantics = [#tpu.dimension_semantics<parallel>], iteration_bounds = array<i64: 1>, scalar_prefetch = 0 : i64, scratch_operands = 0 : i64, tpu.core_type = #tpu.core_type<tc>, window_params = [{transform_indices = @transform_0, window_bounds = array<i64: 8, 512>}, {pipeline_mode = #tpu.pipeline_mode<synchronous>, transform_indices = @transform_1, window_bounds = array<i64: 1, 512>}, {pipeline_mode = #tpu.pipeline_mode<synchronous>, transform_indices = @transform_2, window_bounds = array<i64: 1, 512>}, {pipeline_mode = #tpu.pipeline_mode<synchronous>, transform_indices = @transform_3, window_bounds = array<i64: 512, 512>}, {transform_indices = @transform_4, window_bounds = array<i64: 1, 1, 512>}, {transform_indices = @transform_5, window_bounds = array<i64: 1, 1, 512>}]} {
    %c0 = arith.constant 0 : index
    %c0_0 = arith.constant 0 : index
    %0 = vector.load %arg1[%c0, %c0_0] : memref<8x512xbf16, #tpu.memory_space<vmem>>, vector<8x512xbf16>
    %1 = arith.extf %0 : vector<8x512xbf16> to vector<8x512xf32>
    %c0_1 = arith.constant 0 : index
    %c0_2 = arith.constant 0 : index
    %2 = vector.load %arg2[%c0_1, %c0_2] : memref<1x512xf32, #tpu.memory_space<vmem>>, vector<1x512xf32>
    %3 = vector.broadcast %2 : vector<1x512xf32> to vector<8x512xf32>
    %4 = arith.mulf %1, %3 : vector<8x512xf32>
    %c0_3 = arith.constant 0 : index
    %c0_4 = arith.constant 0 : index
    %5 = vector.load %arg3[%c0_3, %c0_4] : memref<1x512xf32, #tpu.memory_space<vmem>>, vector<1x512xf32>
    %6 = vector.broadcast %5 : vector<1x512xf32> to vector<8x512xf32>
    %7 = arith.addf %4, %6 : vector<8x512xf32>
    %cst = arith.constant 0.00999999977 : f32
    %8 = vector.broadcast %cst : f32 to vector<8x512xf32>
    %9 = arith.mulf %8, %7 : vector<8x512xf32>
    %10 = arith.maximumf %7, %9 : vector<8x512xf32>
    %11 = arith.truncf %10 : vector<8x512xf32> to vector<8x512xbf16>
    %c0_5 = arith.constant 0 : index
    %c0_6 = arith.constant 0 : index
    %12 = vector.load %arg4[%c0_5, %c0_6] : memref<512x512xbf16, #tpu.memory_space<vmem>>, vector<512x512xbf16>
    %cst_7 = arith.constant dense<0.000000e+00> : vector<8x512xf32>
    %13 = tpu.matmul %11, %12, %cst_7 {dimension_numbers = #tpu.dot_dimension_numbers<[1], [0], [0], [1], [0, 0, 1, 1], [], []>} : vector<8x512xbf16>, vector<512x512xbf16>, vector<8x512xf32> -> vector<8x512xf32>
    %cst_8 = arith.constant dense<0.000000e+00> : vector<512xf32>
    %14 = vector.multi_reduction <add>, %13, %cst_8 [0] : vector<8x512xf32> to vector<512xf32>
    %15 = vector.shape_cast %14 : vector<512xf32> to vector<1x512xf32>
    %c0_9 = arith.constant 0 : index
    %c0_10 = arith.constant 0 : index
    %c0_11 = arith.constant 0 : index
    %16 = vector.load %arg5[%c0_9, %c0_10, %c0_11] : memref<1x1x512xf32, #tpu.memory_space<vmem>>, vector<1x1x512xf32>
    %17 = vector.shape_cast %16 : vector<1x1x512xf32> to vector<1x512xf32>
    %18 = vector.shape_cast %15 : vector<1x512xf32> to vector<1x1x512xf32>
    tpu.vector_store %arg5[%c0_9, %c0_10, %c0_11], %18 {strides = array<i32>} : memref<1x1x512xf32, #tpu.memory_space<vmem>>, vector<1x1x512xf32>,
    %19 = arith.mulf %13, %13 : vector<8x512xf32>
    %cst_12 = arith.constant dense<0.000000e+00> : vector<512xf32>
    %20 = vector.multi_reduction <add>, %19, %cst_12 [0] : vector<8x512xf32> to vector<512xf32>
    %21 = vector.shape_cast %20 : vector<512xf32> to vector<1x512xf32>
    %c0_13 = arith.constant 0 : index
    %c0_14 = arith.constant 0 : index
    %c0_15 = arith.constant 0 : index
    %22 = vector.load %arg6[%c0_13, %c0_14, %c0_15] : memref<1x1x512xf32, #tpu.memory_space<vmem>>, vector<1x1x512xf32>
    %23 = vector.shape_cast %22 : vector<1x1x512xf32> to vector<1x512xf32>
    %24 = vector.shape_cast %21 : vector<1x512xf32> to vector<1x1x512xf32>
    tpu.vector_store %arg6[%c0_13, %c0_14, %c0_15], %24 {strides = array<i32>} : memref<1x1x512xf32, #tpu.memory_space<vmem>>, vector<1x1x512xf32>,
    return
  }
  func.func @transform_0(%arg0: i32) -> (i32, i32) {
    %c0_i32 = arith.constant 0 : i32
    %c0_i32_0 = arith.constant 0 : i32
    return %arg0, %c0_i32 : i32, i32
  }
  func.func @transform_1(%arg0: i32) -> (i32, i32) {
    %c0_i32 = arith.constant 0 : i32
    %c0_i32_0 = arith.constant 0 : i32
    %c0_i32_1 = arith.constant 0 : i32
    return %c0_i32, %c0_i32_0 : i32, i32
  }
  func.func @transform_2(%arg0: i32) -> (i32, i32) {
    %c0_i32 = arith.constant 0 : i32
    %c0_i32_0 = arith.constant 0 : i32
    %c0_i32_1 = arith.constant 0 : i32
    return %c0_i32, %c0_i32_0 : i32, i32
  }
  func.func @transform_3(%arg0: i32) -> (i32, i32) {
    %c0_i32 = arith.constant 0 : i32
    %c0_i32_0 = arith.constant 0 : i32
    %c0_i32_1 = arith.constant 0 : i32
    return %c0_i32, %c0_i32_0 : i32, i32
  }
  func.func @transform_4(%arg0: i32) -> (i32, i32, i32) {
    %c0_i32 = arith.constant 0 : i32
    %c0_i32_0 = arith.constant 0 : i32
    %c0_i32_1 = arith.constant 0 : i32
    return %arg0, %c0_i32, %c0_i32_0 : i32, i32, i32
  }
  func.func @transform_5(%arg0: i32) -> (i32, i32, i32) {
    %c0_i32 = arith.constant 0 : i32
    %c0_i32_0 = arith.constant 0 : i32
    %c0_i32_1 = arith.constant 0 : i32
    return %arg0, %c0_i32, %c0_i32_0 : i32, i32, i32
  }
}

module attributes {stable_mosaic.version = 11 : i64} {
  func.func @_tail_kernel(%arg0: i32, %arg1: memref<8x512xbf16, #tpu.memory_space<vmem>>, %arg2: memref<1x512xf32, #tpu.memory_space<vmem>>, %arg3: memref<1x512xf32, #tpu.memory_space<vmem>>, %arg4: memref<512x512xbf16, #tpu.memory_space<vmem>>, %arg5: memref<1x512xf32, #tpu.memory_space<vmem>>, %arg6: memref<1x512xf32, #tpu.memory_space<vmem>>, %arg7: memref<1x512xf32, #tpu.memory_space<vmem>>, %arg8: memref<1x1xf32, #tpu.memory_space<vmem>>, %arg9: memref<1x8xf32, #tpu.memory_space<vmem>>) attributes {dimension_semantics = [#tpu.dimension_semantics<parallel>], iteration_bounds = array<i64: 1>, scalar_prefetch = 0 : i64, scratch_operands = 0 : i64, tpu.core_type = #tpu.core_type<tc>, window_params = [{transform_indices = @transform_0, window_bounds = array<i64: 8, 512>}, {pipeline_mode = #tpu.pipeline_mode<synchronous>, transform_indices = @transform_1, window_bounds = array<i64: 1, 512>}, {pipeline_mode = #tpu.pipeline_mode<synchronous>, transform_indices = @transform_2, window_bounds = array<i64: 1, 512>}, {pipeline_mode = #tpu.pipeline_mode<synchronous>, transform_indices = @transform_3, window_bounds = array<i64: 512, 512>}, {pipeline_mode = #tpu.pipeline_mode<synchronous>, transform_indices = @transform_4, window_bounds = array<i64: 1, 512>}, {pipeline_mode = #tpu.pipeline_mode<synchronous>, transform_indices = @transform_5, window_bounds = array<i64: 1, 512>}, {pipeline_mode = #tpu.pipeline_mode<synchronous>, transform_indices = @transform_6, window_bounds = array<i64: 1, 512>}, {pipeline_mode = #tpu.pipeline_mode<synchronous>, transform_indices = @transform_7, window_bounds = array<i64: 1, 1>}, {transform_indices = @transform_8, window_bounds = array<i64: 1, 8>}]} {
    %c0 = arith.constant 0 : index
    %c0_0 = arith.constant 0 : index
    %0 = vector.load %arg1[%c0, %c0_0] : memref<8x512xbf16, #tpu.memory_space<vmem>>, vector<8x512xbf16>
    %1 = arith.extf %0 : vector<8x512xbf16> to vector<8x512xf32>
    %c0_1 = arith.constant 0 : index
    %c0_2 = arith.constant 0 : index
    %2 = vector.load %arg2[%c0_1, %c0_2] : memref<1x512xf32, #tpu.memory_space<vmem>>, vector<1x512xf32>
    %3 = vector.broadcast %2 : vector<1x512xf32> to vector<8x512xf32>
    %4 = arith.mulf %1, %3 : vector<8x512xf32>
    %c0_3 = arith.constant 0 : index
    %c0_4 = arith.constant 0 : index
    %5 = vector.load %arg3[%c0_3, %c0_4] : memref<1x512xf32, #tpu.memory_space<vmem>>, vector<1x512xf32>
    %6 = vector.broadcast %5 : vector<1x512xf32> to vector<8x512xf32>
    %7 = arith.addf %4, %6 : vector<8x512xf32>
    %cst = arith.constant 0.00999999977 : f32
    %8 = vector.broadcast %cst : f32 to vector<8x512xf32>
    %9 = arith.mulf %8, %7 : vector<8x512xf32>
    %10 = arith.maximumf %7, %9 : vector<8x512xf32>
    %11 = arith.truncf %10 : vector<8x512xf32> to vector<8x512xbf16>
    %c0_5 = arith.constant 0 : index
    %c0_6 = arith.constant 0 : index
    %12 = vector.load %arg4[%c0_5, %c0_6] : memref<512x512xbf16, #tpu.memory_space<vmem>>, vector<512x512xbf16>
    %cst_7 = arith.constant dense<0.000000e+00> : vector<8x512xf32>
    %13 = tpu.matmul %11, %12, %cst_7 {dimension_numbers = #tpu.dot_dimension_numbers<[1], [0], [0], [1], [0, 0, 1, 1], [], []>} : vector<8x512xbf16>, vector<512x512xbf16>, vector<8x512xf32> -> vector<8x512xf32>
    %c0_8 = arith.constant 0 : index
    %c0_9 = arith.constant 0 : index
    %14 = vector.load %arg5[%c0_8, %c0_9] : memref<1x512xf32, #tpu.memory_space<vmem>>, vector<1x512xf32>
    %15 = vector.broadcast %14 : vector<1x512xf32> to vector<8x512xf32>
    %16 = arith.mulf %13, %15 : vector<8x512xf32>
    %c0_10 = arith.constant 0 : index
    %c0_11 = arith.constant 0 : index
    %17 = vector.load %arg6[%c0_10, %c0_11] : memref<1x512xf32, #tpu.memory_space<vmem>>, vector<1x512xf32>
    %18 = vector.broadcast %17 : vector<1x512xf32> to vector<8x512xf32>
    %19 = arith.addf %16, %18 : vector<8x512xf32>
    %cst_12 = arith.constant 0.00999999977 : f32
    %20 = vector.broadcast %cst_12 : f32 to vector<8x512xf32>
    %21 = arith.mulf %20, %19 : vector<8x512xf32>
    %22 = arith.maximumf %19, %21 : vector<8x512xf32>
    %c0_13 = arith.constant 0 : index
    %c0_14 = arith.constant 0 : index
    %23 = vector.load %arg7[%c0_13, %c0_14] : memref<1x512xf32, #tpu.memory_space<vmem>>, vector<1x512xf32>
    %cst_15 = arith.constant dense<0.000000e+00> : vector<1x8xf32>
    %24 = tpu.matmul %23, %22, %cst_15 {dimension_numbers = #tpu.dot_dimension_numbers<[1], [1], [0], [0], [0, 0, 1, 0], [], []>} : vector<1x512xf32>, vector<8x512xf32>, vector<1x8xf32> -> vector<1x8xf32>
    %c0_16 = arith.constant 0 : index
    %c0_17 = arith.constant 0 : index
    %25 = vector.load %arg8[%c0_16, %c0_17] : memref<1x1xf32, #tpu.memory_space<vmem>>, vector<1x1xf32>
    %26 = vector.broadcast %25 : vector<1x1xf32> to vector<1x8xf32>
    %27 = arith.addf %24, %26 : vector<1x8xf32>
    %28 = arith.negf %27 : vector<1x8xf32>
    %29 = math.exp %28 : vector<1x8xf32>
    %cst_18 = arith.constant 1.000000e+00 : f32
    %30 = vector.broadcast %cst_18 : f32 to vector<1x8xf32>
    %31 = arith.addf %30, %29 : vector<1x8xf32>
    %32 = arith.divf %30, %31 : vector<1x8xf32>
    %c0_19 = arith.constant 0 : index
    %c0_20 = arith.constant 0 : index
    %33 = vector.load %arg9[%c0_19, %c0_20] : memref<1x8xf32, #tpu.memory_space<vmem>>, vector<1x8xf32>
    tpu.vector_store %arg9[%c0_19, %c0_20], %32 {strides = array<i32>} : memref<1x8xf32, #tpu.memory_space<vmem>>, vector<1x8xf32>,
    return
  }
  func.func @transform_0(%arg0: i32) -> (i32, i32) {
    %c0_i32 = arith.constant 0 : i32
    %c0_i32_0 = arith.constant 0 : i32
    return %arg0, %c0_i32 : i32, i32
  }
  func.func @transform_1(%arg0: i32) -> (i32, i32) {
    %c0_i32 = arith.constant 0 : i32
    %c0_i32_0 = arith.constant 0 : i32
    %c0_i32_1 = arith.constant 0 : i32
    return %c0_i32, %c0_i32_0 : i32, i32
  }
  func.func @transform_2(%arg0: i32) -> (i32, i32) {
    %c0_i32 = arith.constant 0 : i32
    %c0_i32_0 = arith.constant 0 : i32
    %c0_i32_1 = arith.constant 0 : i32
    return %c0_i32, %c0_i32_0 : i32, i32
  }
  func.func @transform_3(%arg0: i32) -> (i32, i32) {
    %c0_i32 = arith.constant 0 : i32
    %c0_i32_0 = arith.constant 0 : i32
    %c0_i32_1 = arith.constant 0 : i32
    return %c0_i32, %c0_i32_0 : i32, i32
  }
  func.func @transform_4(%arg0: i32) -> (i32, i32) {
    %c0_i32 = arith.constant 0 : i32
    %c0_i32_0 = arith.constant 0 : i32
    %c0_i32_1 = arith.constant 0 : i32
    return %c0_i32, %c0_i32_0 : i32, i32
  }
  func.func @transform_5(%arg0: i32) -> (i32, i32) {
    %c0_i32 = arith.constant 0 : i32
    %c0_i32_0 = arith.constant 0 : i32
    %c0_i32_1 = arith.constant 0 : i32
    return %c0_i32, %c0_i32_0 : i32, i32
  }
  func.func @transform_6(%arg0: i32) -> (i32, i32) {
    %c0_i32 = arith.constant 0 : i32
    %c0_i32_0 = arith.constant 0 : i32
    %c0_i32_1 = arith.constant 0 : i32
    return %c0_i32, %c0_i32_0 : i32, i32
  }
  func.func @transform_7(%arg0: i32) -> (i32, i32) {
    %c0_i32 = arith.constant 0 : i32
    %c0_i32_0 = arith.constant 0 : i32
    %c0_i32_1 = arith.constant 0 : i32
    return %c0_i32, %c0_i32_0 : i32, i32
  }
  func.func @transform_8(%arg0: i32) -> (i32, i32) {
    %c0_i32 = arith.constant 0 : i32
    %c0_i32_0 = arith.constant 0 : i32
    return %c0_i32, %arg0 : i32, i32
  }
}

</mosaic_0001>

<llo_original>
// kernel: box_discriminator_forward.2
$region0: #{box_discriminator_forward.2}
  #allocation0 [shape = 'u32[]', space=smem, size = 0x4, offset = 0x4, fixed_abs, tag = 'smem constant byte address 0x4 - core index']
  #allocation1 [shape = 'u32[144,128]{1,0:T(1,128)}', space=vmem, size = 0x12000, scoped, tag = 'internal scratch']
  %s0 = inlined_call_operand.vmem [shape: bf16[8,512], index: 0, kind: input, shape index: {}]
  %s1 = inlined_call_operand.vmem [shape: f32[1,512], index: 1, kind: input, shape index: {}]
  %s2 = inlined_call_operand.vmem [shape: f32[1,512], index: 2, kind: input, shape index: {}]
  %s3 = inlined_call_operand.vmem [shape: bf16[512,512], index: 3, kind: input, shape index: {}]
  %s4 = inlined_call_operand.vmem [shape: f32[1,1,512], index: 4, kind: output, shape index: {0}]
  %s5 = inlined_call_operand.vmem [shape: f32[1,1,512], index: 5, kind: output, shape index: {1}]
  %6 = xla_tuple %s4, %s5
  %s7 = sld [smem:[#allocation0]]
  $region34: #{box_discriminator_forward.2} parent=0
    _
  %s9 = ssub.s32 1, %s7
  %s10 = scalar_select 0, %s9, %s7
  // Predicated region
  $region2: #{box_discriminator_forward.2} parent=0 // pred_check
    _
  $region3: #{box_discriminator_forward.2} parent=0 // pred_check_branch
    %12 = sbr.rel (0) target = $region5
  $region4: #{box_discriminator_forward.2} parent=0 // pred_region
    _
  $region5: #{box_discriminator_forward.2} parent=0 // pred_fallthru
    _
  // Predicated region
  $region6: #{box_discriminator_forward.2} parent=0 // pred_check
    _
  $region7: #{box_discriminator_forward.2} parent=0 // pred_check_branch
    %14 = sbr.rel (0) target = $region9
  $region8: #{box_discriminator_forward.2} parent=0 // pred_region
    _
  $region9: #{box_discriminator_forward.2} parent=0 // pred_fallthru
    _
  // Predicated region
  $region10: #{box_discriminator_forward.2} parent=0 // pred_check
    _
  $region11: #{box_discriminator_forward.2} parent=0 // pred_check_branch
    %16 = sbr.rel (0) target = $region13
  $region12: #{box_discriminator_forward.2} parent=0 // pred_region
    _
  $region13: #{box_discriminator_forward.2} parent=0 // pred_fallthru
    _
  // Predicated region
  $region14: #{box_discriminator_forward.2} parent=0 // pred_check
    _
  $region15: #{box_discriminator_forward.2} parent=0 // pred_check_branch
    %18 = sbr.rel (0) target = $region17
  $region16: #{box_discriminator_forward.2} parent=0 // pred_region
    _
  $region17: #{box_discriminator_forward.2} parent=0 // pred_fallthru
    _
  %v19 = vld [vmem:[%s0] sm:$0xff]
  %v20 = vld [vmem:[%s0 + $0x8] sm:$0xff]
  %v21 = vunpack.c.l.bf16 %v19
  %v22 = vunpack.c.h.bf16 %v19
  %v23 = vunpack.c.l.bf16 %v20
  %v24 = vunpack.c.h.bf16 %v20
  %v25 = vld [vmem:[%s1] sm:$0xf]
  %v27 = vlaneseq
  %v28 = vshrl.u32 %v27, 7
  %v29 = vsub.s32 0, %v28
  %v30 = vrot.slane %v25, %v29
  %v31 = vlaneseq
  %v32 = vshrl.u32 %v31, 7
  %v33 = vsub.s32 1, %v32
  %v34 = vrot.slane %v25, %v33
  %v35 = vlaneseq
  %v36 = vshrl.u32 %v35, 7
  %v37 = vsub.s32 2, %v36
  %v38 = vrot.slane %v25, %v37
  %v39 = vlaneseq
  %v40 = vshrl.u32 %v39, 7
  %v41 = vsub.s32 3, %v40
  %v42 = vrot.slane %v25, %v41
  %v47 = vmul.f32 %v21, %v30
  %v48 = vmul.f32 %v22, %v34
  %v49 = vmul.f32 %v23, %v38
  %v50 = vmul.f32 %v24, %v42
  %v51 = vld [vmem:[%s2] sm:$0xf]
  %v53 = vlaneseq
  %v54 = vshrl.u32 %v53, 7
  %v55 = vsub.s32 0, %v54
  %v56 = vrot.slane %v51, %v55
  %v57 = vlaneseq
  %v58 = vshrl.u32 %v57, 7
  %v59 = vsub.s32 1, %v58
  %v60 = vrot.slane %v51, %v59
  %v61 = vlaneseq
  %v62 = vshrl.u32 %v61, 7
  %v63 = vsub.s32 2, %v62
  %v64 = vrot.slane %v51, %v63
  %v65 = vlaneseq
  %v66 = vshrl.u32 %v65, 7
  %v67 = vsub.s32 3, %v66
  %v68 = vrot.slane %v51, %v67
  %v73 = vadd.f32 %v47, %v56
  %v74 = vadd.f32 %v48, %v60
  %v75 = vadd.f32 %v49, %v64
  %v76 = vadd.f32 %v50, %v68
  %v77 = vmul.f32 %v73, 0.01
  %v78 = vmul.f32 %v74, 0.01
  %v79 = vmul.f32 %v75, 0.01
  %v80 = vmul.f32 %v76, 0.01
  %v81 = vmax.f32 %v73, %v77
  %v82 = vmax.f32 %v74, %v78
  %v83 = vmax.f32 %v75, %v79
  %v84 = vmax.f32 %v76, %v80
  %v85 = vpack.c.bf16 %v81, %v81
  %v86 = vpack.c.bf16 %v82, %v82
  %v87 = vpack.c.bf16 %v83, %v83
  %v88 = vpack.c.bf16 %v84, %v84
  %v89 = vld [vmem:[%s3] sm:$0xff]
  %v90 = vld [vmem:[%s3 + $0x8] sm:$0xff]
  %v91 = vld [vmem:[%s3 + $0x10] sm:$0xff]
  %v92 = vld [vmem:[%s3 + $0x18] sm:$0xff]
  %v93 = vld [vmem:[%s3 + $0x20] sm:$0xff]
  %v94 = vld [vmem:[%s3 + $0x28] sm:$0xff]
  %v95 = vld [vmem:[%s3 + $0x30] sm:$0xff]
  %v96 = vld [vmem:[%s3 + $0x38] sm:$0xff]
  %v97 = vld [vmem:[%s3 + $0x40] sm:$0xff]
  %v98 = vld [vmem:[%s3 + $0x48] sm:$0xff]
  %v99 = vld [vmem:[%s3 + $0x50] sm:$0xff]
  %v100 = vld [vmem:[%s3 + $0x58] sm:$0xff]
  %v101 = vld [vmem:[%s3 + $0x60] sm:$0xff]
  %v102 = vld [vmem:[%s3 + $0x68] sm:$0xff]
  %v103 = vld [vmem:[%s3 + $0x70] sm:$0xff]
  %v104 = vld [vmem:[%s3 + $0x78] sm:$0xff]
  %v105 = vld [vmem:[%s3 + $0x80] sm:$0xff]
  %v106 = vld [vmem:[%s3 + $0x88] sm:$0xff]
  %v107 = vld [vmem:[%s3 + $0x90] sm:$0xff]
  %v108 = vld [vmem:[%s3 + $0x98] sm:$0xff]
  %v109 = vld [vmem:[%s3 + $0xa0] sm:$0xff]
  %v110 = vld [vmem:[%s3 + $0xa8] sm:$0xff]
  %v111 = vld [vmem:[%s3 + $0xb0] sm:$0xff]
  %v112 = vld [vmem:[%s3 + $0xb8] sm:$0xff]
  %v113 = vld [vmem:[%s3 + $0xc0] sm:$0xff]
  %v114 = vld [vmem:[%s3 + $0xc8] sm:$0xff]
  %v115 = vld [vmem:[%s3 + $0xd0] sm:$0xff]
  %v116 = vld [vmem:[%s3 + $0xd8] sm:$0xff]
  %v117 = vld [vmem:[%s3 + $0xe0] sm:$0xff]
  %v118 = vld [vmem:[%s3 + $0xe8] sm:$0xff]
  %v119 = vld [vmem:[%s3 + $0xf0] sm:$0xff]
  %v120 = vld [vmem:[%s3 + $0xf8] sm:$0xff]
  %v121 = vld [vmem:[%s3 + $0x100] sm:$0xff]
  %v122 = vld [vmem:[%s3 + $0x108] sm:$0xff]
  %v123 = vld [vmem:[%s3 + $0x110] sm:$0xff]
  %v124 = vld [vmem:[%s3 + $0x118] sm:$0xff]
  %v125 = vld [vmem:[%s3 + $0x120] sm:$0xff]
  %v126 = vld [vmem:[%s3 + $0x128] sm:$0xff]
  %v127 = vld [vmem:[%s3 + $0x130] sm:$0xff]
  %v128 = vld [vmem:[%s3 + $0x138] sm:$0xff]
  %v129 = vld [vmem:[%s3 + $0x140] sm:$0xff]
  %v130 = vld [vmem:[%s3 + $0x148] sm:$0xff]
  %v131 = vld [vmem:[%s3 + $0x150] sm:$0xff]
  %v132 = vld [vmem:[%s3 + $0x158] sm:$0xff]
  %v133 = vld [vmem:[%s3 + $0x160] sm:$0xff]
  %v134 = vld [vmem:[%s3 + $0x168] sm:$0xff]
  %v135 = vld [vmem:[%s3 + $0x170] sm:$0xff]
  %v136 = vld [vmem:[%s3 + $0x178] sm:$0xff]
  %v137 = vld [vmem:[%s3 + $0x180] sm:$0xff]
  %v138 = vld [vmem:[%s3 + $0x188] sm:$0xff]
  %v139 = vld [vmem:[%s3 + $0x190] sm:$0xff]
  %v140 = vld [vmem:[%s3 + $0x198] sm:$0xff]
  %v141 = vld [vmem:[%s3 + $0x1a0] sm:$0xff]
  %v142 = vld [vmem:[%s3 + $0x1a8] sm:$0xff]
  %v143 = vld [vmem:[%s3 + $0x1b0] sm:$0xff]
  %v144 = vld [vmem:[%s3 + $0x1b8] sm:$0xff]
  %v145 = vld [vmem:[%s3 + $0x1c0] sm:$0xff]
  %v146 = vld [vmem:[%s3 + $0x1c8] sm:$0xff]
  %v147 = vld [vmem:[%s3 + $0x1d0] sm:$0xff]
  %v148 = vld [vmem:[%s3 + $0x1d8] sm:$0xff]
  %v149 = vld [vmem:[%s3 + $0x1e0] sm:$0xff]
  %v150 = vld [vmem:[%s3 + $0x1e8] sm:$0xff]
  %v151 = vld [vmem:[%s3 + $0x1f0] sm:$0xff]
  %v152 = vld [vmem:[%s3 + $0x1f8] sm:$0xff]
  %v153 = vld [vmem:[%s3 + $0x200] sm:$0xff]
  %v154 = vld [vmem:[%s3 + $0x208] sm:$0xff]
  %v155 = vld [vmem:[%s3 + $0x210] sm:$0xff]
  %v156 = vld [vmem:[%s3 + $0x218] sm:$0xff]
  %v157 = vld [vmem:[%s3 + $0x220] sm:$0xff]
  %v158 = vld [vmem:[%s3 + $0x228] sm:$0xff]
  %v159 = vld [vmem:[%s3 + $0x230] sm:$0xff]
  %v160 = vld [vmem:[%s3 + $0x238] sm:$0xff]
  %v161 = vld [vmem:[%s3 + $0x240] sm:$0xff]
  %v162 = vld [vmem:[%s3 + $0x248] sm:$0xff]
  %v163 = vld [vmem:[%s3 + $0x250] sm:$0xff]
  %v164 = vld [vmem:[%s3 + $0x258] sm:$0xff]
  %v165 = vld [vmem:[%s3 + $0x260] sm:$0xff]
  %v166 = vld [vmem:[%s3 + $0x268] sm:$0xff]
  %v167 = vld [vmem:[%s3 + $0x270] sm:$0xff]
  %v168 = vld [vmem:[%s3 + $0x278] sm:$0xff]
  %v169 = vld [vmem:[%s3 + $0x280] sm:$0xff]
  %v170 = vld [vmem:[%s3 + $0x288] sm:$0xff]
  %v171 = vld [vmem:[%s3 + $0x290] sm:$0xff]
  %v172 = vld [vmem:[%s3 + $0x298] sm:$0xff]
  %v173 = vld [vmem:[%s3 + $0x2a0] sm:$0xff]
  %v174 = vld [vmem:[%s3 + $0x2a8] sm:$0xff]
  %v175 = vld [vmem:[%s3 + $0x2b0] sm:$0xff]
  %v176 = vld [vmem:[%s3 + $0x2b8] sm:$0xff]
  %v177 = vld [vmem:[%s3 + $0x2c0] sm:$0xff]
  %v178 = vld [vmem:[%s3 + $0x2c8] sm:$0xff]
  %v179 = vld [vmem:[%s3 + $0x2d0] sm:$0xff]
  %v180 = vld [vmem:[%s3 + $0x2d8] sm:$0xff]
  %v181 = vld [vmem:[%s3 + $0x2e0] sm:$0xff]
  %v182 = vld [vmem:[%s3 + $0x2e8] sm:$0xff]
  %v183 = vld [vmem:[%s3 + $0x2f0] sm:$0xff]
  %v184 = vld [vmem:[%s3 + $0x2f8] sm:$0xff]
  %v185 = vld [vmem:[%s3 + $0x300] sm:$0xff]
  %v186 = vld [vmem:[%s3 + $0x308] sm:$0xff]
  %v187 = vld [vmem:[%s3 + $0x310] sm:$0xff]
  %v188 = vld [vmem:[%s3 + $0x318] sm:$0xff]
  %v189 = vld [vmem:[%s3 + $0x320] sm:$0xff]
  %v190 = vld [vmem:[%s3 + $0x328] sm:$0xff]
  %v191 = vld [vmem:[%s3 + $0x330] sm:$0xff]
  %v192 = vld [vmem:[%s3 + $0x338] sm:$0xff]
  %v193 = vld [vmem:[%s3 + $0x340] sm:$0xff]
  %v194 = vld [vmem:[%s3 + $0x348] sm:$0xff]
  %v195 = vld [vmem:[%s3 + $0x350] sm:$0xff]
  %v196 = vld [vmem:[%s3 + $0x358] sm:$0xff]
  %v197 = vld [vmem:[%s3 + $0x360] sm:$0xff]
  %v198 = vld [vmem:[%s3 + $0x368] sm:$0xff]
  %v199 = vld [vmem:[%s3 + $0x370] sm:$0xff]
  %v200 = vld [vmem:[%s3 + $0x378] sm:$0xff]
  %v201 = vld [vmem:[%s3 + $0x380] sm:$0xff]
  %v202 = vld [vmem:[%s3 + $0x388] sm:$0xff]
  %v203 = vld [vmem:[%s3 + $0x390] sm:$0xff]
  %v204 = vld [vmem:[%s3 + $0x398] sm:$0xff]
  %v205 = vld [vmem:[%s3 + $0x3a0] sm:$0xff]
  %v206 = vld [vmem:[%s3 + $0x3a8] sm:$0xff]
  %v207 = vld [vmem:[%s3 + $0x3b0] sm:$0xff]
  %v208 = vld [vmem:[%s3 + $0x3b8] sm:$0xff]
  %v209 = vld [vmem:[%s3 + $0x3c0] sm:$0xff]
  %v210 = vld [vmem:[%s3 + $0x3c8] sm:$0xff]
  %v211 = vld [vmem:[%s3 + $0x3d0] sm:$0xff]
  %v212 = vld [vmem:[%s3 + $0x3d8] sm:$0xff]
  %v213 = vld [vmem:[%s3 + $0x3e0] sm:$0xff]
  %v214 = vld [vmem:[%s3 + $0x3e8] sm:$0xff]
  %v215 = vld [vmem:[%s3 + $0x3f0] sm:$0xff]
  %v216 = vld [vmem:[%s3 + $0x3f8] sm:$0xff]
  %v345 = vunpack.c.l.b16 %v89
  %v346 = vunpack.c.h.b16 %v89
  %v347 = vunpack.c.l.b16 %v90
  %v348 = vunpack.c.h.b16 %v90
  %v349 = vunpack.c.l.b16 %v91
  %v350 = vunpack.c.h.b16 %v91
  %v351 = vunpack.c.l.b16 %v92
  %v352 = vunpack.c.h.b16 %v92
  %v353 = vunpack.c.l.b16 %v93
  %v354 = vunpack.c.h.b16 %v93
  %v355 = vunpack.c.l.b16 %v94
  %v356 = vunpack.c.h.b16 %v94
  %v357 = vunpack.c.l.b16 %v95
  %v358 = vunpack.c.h.b16 %v95
  %v359 = vunpack.c.l.b16 %v96
  %v360 = vunpack.c.h.b16 %v96
  %v361 = vunpack.c.l.b16 %v97
  %v362 = vunpack.c.h.b16 %v97
  %v363 = vunpack.c.l.b16 %v98
  %v364 = vunpack.c.h.b16 %v98
  %v365 = vunpack.c.l.b16 %v99
  %v366 = vunpack.c.h.b16 %v99
  %v367 = vunpack.c.l.b16 %v100
  %v368 = vunpack.c.h.b16 %v100
  %v369 = vunpack.c.l.b16 %v101
  %v370 = vunpack.c.h.b16 %v101
  %v371 = vunpack.c.l.b16 %v102
  %v372 = vunpack.c.h.b16 %v102
  %v373 = vunpack.c.l.b16 %v103
  %v374 = vunpack.c.h.b16 %v103
  %v375 = vunpack.c.l.b16 %v104
  %v376 = vunpack.c.h.b16 %v104
  %v377 = vunpack.c.l.b16 %v105
  %v378 = vunpack.c.h.b16 %v105
  %v379 = vunpack.c.l.b16 %v106
  %v380 = vunpack.c.h.b16 %v106
  %v381 = vunpack.c.l.b16 %v107
  %v382 = vunpack.c.h.b16 %v107
  %v383 = vunpack.c.l.b16 %v108
  %v384 = vunpack.c.h.b16 %v108
  %v385 = vunpack.c.l.b16 %v109
  %v386 = vunpack.c.h.b16 %v109
  %v387 = vunpack.c.l.b16 %v110
  %v388 = vunpack.c.h.b16 %v110
  %v389 = vunpack.c.l.b16 %v111
  %v390 = vunpack.c.h.b16 %v111
  %v391 = vunpack.c.l.b16 %v112
  %v392 = vunpack.c.h.b16 %v112
  %v393 = vunpack.c.l.b16 %v113
  %v394 = vunpack.c.h.b16 %v113
  %v395 = vunpack.c.l.b16 %v114
  %v396 = vunpack.c.h.b16 %v114
  %v397 = vunpack.c.l.b16 %v115
  %v398 = vunpack.c.h.b16 %v115
  %v399 = vunpack.c.l.b16 %v116
  %v400 = vunpack.c.h.b16 %v116
  %v401 = vunpack.c.l.b16 %v117
  %v402 = vunpack.c.h.b16 %v117
  %v403 = vunpack.c.l.b16 %v118
  %v404 = vunpack.c.h.b16 %v118
  %v405 = vunpack.c.l.b16 %v119
  %v406 = vunpack.c.h.b16 %v119
  %v407 = vunpack.c.l.b16 %v120
  %v408 = vunpack.c.h.b16 %v120
  %v409 = vunpack.c.l.b16 %v121
  %v410 = vunpack.c.h.b16 %v121
  %v411 = vunpack.c.l.b16 %v122
  %v412 = vunpack.c.h.b16 %v122
  %v413 = vunpack.c.l.b16 %v123
  %v414 = vunpack.c.h.b16 %v123
  %v415 = vunpack.c.l.b16 %v124
  %v416 = vunpack.c.h.b16 %v124
  %v417 = vunpack.c.l.b16 %v125
  %v418 = vunpack.c.h.b16 %v125
  %v419 = vunpack.c.l.b16 %v126
  %v420 = vunpack.c.h.b16 %v126
  %v421 = vunpack.c.l.b16 %v127
  %v422 = vunpack.c.h.b16 %v127
  %v423 = vunpack.c.l.b16 %v128
  %v424 = vunpack.c.h.b16 %v128
  %v425 = vunpack.c.l.b16 %v129
  %v426 = vunpack.c.h.b16 %v129
  %v427 = vunpack.c.l.b16 %v130
  %v428 = vunpack.c.h.b16 %v130
  %v429 = vunpack.c.l.b16 %v131
  %v430 = vunpack.c.h.b16 %v131
  %v431 = vunpack.c.l.b16 %v132
  %v432 = vunpack.c.h.b16 %v132
  %v433 = vunpack.c.l.b16 %v133
  %v434 = vunpack.c.h.b16 %v133
  %v435 = vunpack.c.l.b16 %v134
  %v436 = vunpack.c.h.b16 %v134
  %v437 = vunpack.c.l.b16 %v135
  %v438 = vunpack.c.h.b16 %v135
  %v439 = vunpack.c.l.b16 %v136
  %v440 = vunpack.c.h.b16 %v136
  %v441 = vunpack.c.l.b16 %v137
  %v442 = vunpack.c.h.b16 %v137
  %v443 = vunpack.c.l.b16 %v138
  %v444 = vunpack.c.h.b16 %v138
  %v445 = vunpack.c.l.b16 %v139
  %v446 = vunpack.c.h.b16 %v139
  %v447 = vunpack.c.l.b16 %v140
  %v448 = vunpack.c.h.b16 %v140
  %v449 = vunpack.c.l.b16 %v141
  %v450 = vunpack.c.h.b16 %v141
  %v451 = vunpack.c.l.b16 %v142
  %v452 = vunpack.c.h.b16 %v142
  %v453 = vunpack.c.l.b16 %v143
  %v454 = vunpack.c.h.b16 %v143
  %v455 = vunpack.c.l.b16 %v144
  %v456 = vunpack.c.h.b16 %v144
  %v457 = vunpack.c.l.b16 %v145
  %v458 = vunpack.c.h.b16 %v145
  %v459 = vunpack.c.l.b16 %v146
  %v460 = vunpack.c.h.b16 %v146
  %v461 = vunpack.c.l.b16 %v147
  %v462 = vunpack.c.h.b16 %v147
  %v463 = vunpack.c.l.b16 %v148
  %v464 = vunpack.c.h.b16 %v148
  %v465 = vunpack.c.l.b16 %v149
  %v466 = vunpack.c.h.b16 %v149
  %v467 = vunpack.c.l.b16 %v150
  %v468 = vunpack.c.h.b16 %v150
  %v469 = vunpack.c.l.b16 %v151
  %v470 = vunpack.c.h.b16 %v151
  %v471 = vunpack.c.l.b16 %v152
  %v472 = vunpack.c.h.b16 %v152
  %v473 = vunpack.c.l.b16 %v153
  %v474 = vunpack.c.h.b16 %v153
  %v475 = vunpack.c.l.b16 %v154
  %v476 = vunpack.c.h.b16 %v154
  %v477 = vunpack.c.l.b16 %v155
  %v478 = vunpack.c.h.b16 %v155
  %v479 = vunpack.c.l.b16 %v156
  %v480 = vunpack.c.h.b16 %v156
  %v481 = vunpack.c.l.b16 %v157
  %v482 = vunpack.c.h.b16 %v157
  %v483 = vunpack.c.l.b16 %v158
  %v484 = vunpack.c.h.b16 %v158
  %v485 = vunpack.c.l.b16 %v159
  %v486 = vunpack.c.h.b16 %v159
  %v487 = vunpack.c.l.b16 %v160
  %v488 = vunpack.c.h.b16 %v160
  %v489 = vunpack.c.l.b16 %v161
  %v490 = vunpack.c.h.b16 %v161
  %v491 = vunpack.c.l.b16 %v162
  %v492 = vunpack.c.h.b16 %v162
  %v493 = vunpack.c.l.b16 %v163
  %v494 = vunpack.c.h.b16 %v163
  %v495 = vunpack.c.l.b16 %v164
  %v496 = vunpack.c.h.b16 %v164
  %v497 = vunpack.c.l.b16 %v165
  %v498 = vunpack.c.h.b16 %v165
  %v499 = vunpack.c.l.b16 %v166
  %v500 = vunpack.c.h.b16 %v166
  %v501 = vunpack.c.l.b16 %v167
  %v502 = vunpack.c.h.b16 %v167
  %v503 = vunpack.c.l.b16 %v168
  %v504 = vunpack.c.h.b16 %v168
  %v505 = vunpack.c.l.b16 %v169
  %v506 = vunpack.c.h.b16 %v169
  %v507 = vunpack.c.l.b16 %v170
  %v508 = vunpack.c.h.b16 %v170
  %v509 = vunpack.c.l.b16 %v171
  %v510 = vunpack.c.h.b16 %v171
  %v511 = vunpack.c.l.b16 %v172
  %v512 = vunpack.c.h.b16 %v172
  %v513 = vunpack.c.l.b16 %v173
  %v514 = vunpack.c.h.b16 %v173
  %v515 = vunpack.c.l.b16 %v174
  %v516 = vunpack.c.h.b16 %v174
  %v517 = vunpack.c.l.b16 %v175
  %v518 = vunpack.c.h.b16 %v175
  %v519 = vunpack.c.l.b16 %v176
  %v520 = vunpack.c.h.b16 %v176
  %v521 = vunpack.c.l.b16 %v177
  %v522 = vunpack.c.h.b16 %v177
  %v523 = vunpack.c.l.b16 %v178
  %v524 = vunpack.c.h.b16 %v178
  %v525 = vunpack.c.l.b16 %v179
  %v526 = vunpack.c.h.b16 %v179
  %v527 = vunpack.c.l.b16 %v180
  %v528 = vunpack.c.h.b16 %v180
  %v529 = vunpack.c.l.b16 %v181
  %v530 = vunpack.c.h.b16 %v181
  %v531 = vunpack.c.l.b16 %v182
  %v532 = vunpack.c.h.b16 %v182
  %v533 = vunpack.c.l.b16 %v183
  %v534 = vunpack.c.h.b16 %v183
  %v535 = vunpack.c.l.b16 %v184
  %v536 = vunpack.c.h.b16 %v184
  %v537 = vunpack.c.l.b16 %v185
  %v538 = vunpack.c.h.b16 %v185
  %v539 = vunpack.c.l.b16 %v186
  %v540 = vunpack.c.h.b16 %v186
  %v541 = vunpack.c.l.b16 %v187
  %v542 = vunpack.c.h.b16 %v187
  %v543 = vunpack.c.l.b16 %v188
  %v544 = vunpack.c.h.b16 %v188
  %v545 = vunpack.c.l.b16 %v189
  %v546 = vunpack.c.h.b16 %v189
  %v547 = vunpack.c.l.b16 %v190
  %v548 = vunpack.c.h.b16 %v190
  %v549 = vunpack.c.l.b16 %v191
  %v550 = vunpack.c.h.b16 %v191
  %v551 = vunpack.c.l.b16 %v192
  %v552 = vunpack.c.h.b16 %v192
  %v553 = vunpack.c.l.b16 %v193
  %v554 = vunpack.c.h.b16 %v193
  %v555 = vunpack.c.l.b16 %v194
  %v556 = vunpack.c.h.b16 %v194
  %v557 = vunpack.c.l.b16 %v195
  %v558 = vunpack.c.h.b16 %v195
  %v559 = vunpack.c.l.b16 %v196
  %v560 = vunpack.c.h.b16 %v196
  %v561 = vunpack.c.l.b16 %v197
  %v562 = vunpack.c.h.b16 %v197
  %v563 = vunpack.c.l.b16 %v198
  %v564 = vunpack.c.h.b16 %v198
  %v565 = vunpack.c.l.b16 %v199
  %v566 = vunpack.c.h.b16 %v199
  %v567 = vunpack.c.l.b16 %v200
  %v568 = vunpack.c.h.b16 %v200
  %v569 = vunpack.c.l.b16 %v201
  %v570 = vunpack.c.h.b16 %v201
  %v571 = vunpack.c.l.b16 %v202
  %v572 = vunpack.c.h.b16 %v202
  %v573 = vunpack.c.l.b16 %v203
  %v574 = vunpack.c.h.b16 %v203
  %v575 = vunpack.c.l.b16 %v204
  %v576 = vunpack.c.h.b16 %v204
  %v577 = vunpack.c.l.b16 %v205
  %v578 = vunpack.c.h.b16 %v205
  %v579 = vunpack.c.l.b16 %v206
  %v580 = vunpack.c.h.b16 %v206
  %v581 = vunpack.c.l.b16 %v207
  %v582 = vunpack.c.h.b16 %v207
  %v583 = vunpack.c.l.b16 %v208
  %v584 = vunpack.c.h.b16 %v208
  %v585 = vunpack.c.l.b16 %v209
  %v586 = vunpack.c.h.b16 %v209
  %v587 = vunpack.c.l.b16 %v210
  %v588 = vunpack.c.h.b16 %v210
  %v589 = vunpack.c.l.b16 %v211
  %v590 = vunpack.c.h.b16 %v211
  %v591 = vunpack.c.l.b16 %v212
  %v592 = vunpack.c.h.b16 %v212
  %v593 = vunpack.c.l.b16 %v213
  %v594 = vunpack.c.h.b16 %v213
  %v595 = vunpack.c.l.b16 %v214
  %v596 = vunpack.c.h.b16 %v214
  %v597 = vunpack.c.l.b16 %v215
  %v598 = vunpack.c.h.b16 %v215
  %v599 = vunpack.c.l.b16 %v216
  %v600 = vunpack.c.h.b16 %v216
  %v601 = vpack.c.b16 %v349, %v345
  %v602 = vpack.c.b16 %v350, %v346
  %v603 = vpack.c.b16 %v351, %v347
  %v604 = vpack.c.b16 %v352, %v348
  %v605 = vpack.c.b16 %v357, %v353
  %v606 = vpack.c.b16 %v358, %v354
  %v607 = vpack.c.b16 %v359, %v355
  %v608 = vpack.c.b16 %v360, %v356
  %v609 = vpack.c.b16 %v365, %v361
  %v610 = vpack.c.b16 %v366, %v362
  %v611 = vpack.c.b16 %v367, %v363
  %v612 = vpack.c.b16 %v368, %v364
  %v613 = vpack.c.b16 %v373, %v369
  %v614 = vpack.c.b16 %v374, %v370
  %v615 = vpack.c.b16 %v375, %v371
  %v616 = vpack.c.b16 %v376, %v372
  %v617 = vpack.c.b16 %v381, %v377
  %v618 = vpack.c.b16 %v382, %v378
  %v619 = vpack.c.b16 %v383, %v379
  %v620 = vpack.c.b16 %v384, %v380
  %v621 = vpack.c.b16 %v389, %v385
  %v622 = vpack.c.b16 %v390, %v386
  %v623 = vpack.c.b16 %v391, %v387
  %v624 = vpack.c.b16 %v392, %v388
  %v625 = vpack.c.b16 %v397, %v393
  %v626 = vpack.c.b16 %v398, %v394
  %v627 = vpack.c.b16 %v399, %v395
  %v628 = vpack.c.b16 %v400, %v396
  %v629 = vpack.c.b16 %v405, %v401
  %v630 = vpack.c.b16 %v406, %v402
  %v631 = vpack.c.b16 %v407, %v403
  %v632 = vpack.c.b16 %v408, %v404
  %v633 = vpack.c.b16 %v413, %v409
  %v634 = vpack.c.b16 %v414, %v410
  %v635 = vpack.c.b16 %v415, %v411
  %v636 = vpack.c.b16 %v416, %v412
  %v637 = vpack.c.b16 %v421, %v417
  %v638 = vpack.c.b16 %v422, %v418
  %v639 = vpack.c.b16 %v423, %v419
  %v640 = vpack.c.b16 %v424, %v420
  %v641 = vpack.c.b16 %v429, %v425
  %v642 = vpack.c.b16 %v430, %v426
  %v643 = vpack.c.b16 %v431, %v427
  %v644 = vpack.c.b16 %v432, %v428
  %v645 = vpack.c.b16 %v437, %v433
  %v646 = vpack.c.b16 %v438, %v434
  %v647 = vpack.c.b16 %v439, %v435
  %v648 = vpack.c.b16 %v440, %v436
  %v649 = vpack.c.b16 %v445, %v441
  %v650 = vpack.c.b16 %v446, %v442
  %v651 = vpack.c.b16 %v447, %v443
  %v652 = vpack.c.b16 %v448, %v444
  %v653 = vpack.c.b16 %v453, %v449
  %v654 = vpack.c.b16 %v454, %v450
  %v655 = vpack.c.b16 %v455, %v451
  %v656 = vpack.c.b16 %v456, %v452
  %v657 = vpack.c.b16 %v461, %v457
  %v658 = vpack.c.b16 %v462, %v458
  %v659 = vpack.c.b16 %v463, %v459
  %v660 = vpack.c.b16 %v464, %v460
  %v661 = vpack.c.b16 %v469, %v465
  %v662 = vpack.c.b16 %v470, %v466
  %v663 = vpack.c.b16 %v471, %v467
  %v664 = vpack.c.b16 %v472, %v468
  %v665 = vpack.c.b16 %v477, %v473
  %v666 = vpack.c.b16 %v478, %v474
  %v667 = vpack.c.b16 %v479, %v475
  %v668 = vpack.c.b16 %v480, %v476
  %v669 = vpack.c.b16 %v485, %v481
  %v670 = vpack.c.b16 %v486, %v482
  %v671 = vpack.c.b16 %v487, %v483
  %v672 = vpack.c.b16 %v488, %v484
  %v673 = vpack.c.b16 %v493, %v489
  %v674 = vpack.c.b16 %v494, %v490
  %v675 = vpack.c.b16 %v495, %v491
  %v676 = vpack.c.b16 %v496, %v492
  %v677 = vpack.c.b16 %v501, %v497
  %v678 = vpack.c.b16 %v502, %v498
  %v679 = vpack.c.b16 %v503, %v499
  %v680 = vpack.c.b16 %v504, %v500
  %v681 = vpack.c.b16 %v509, %v505
  %v682 = vpack.c.b16 %v510, %v506
  %v683 = vpack.c.b16 %v511, %v507
  %v684 = vpack.c.b16 %v512, %v508
  %v685 = vpack.c.b16 %v517, %v513
  %v686 = vpack.c.b16 %v518, %v514
  %v687 = vpack.c.b16 %v519, %v515
  %v688 = vpack.c.b16 %v520, %v516
  %v689 = vpack.c.b16 %v525, %v521
  %v690 = vpack.c.b16 %v526, %v522
  %v691 = vpack.c.b16 %v527, %v523
  %v692 = vpack.c.b16 %v528, %v524
  %v693 = vpack.c.b16 %v533, %v529
  %v694 = vpack.c.b16 %v534, %v530
  %v695 = vpack.c.b16 %v535, %v531
  %v696 = vpack.c.b16 %v536, %v532
  %v697 = vpack.c.b16 %v541, %v537
  %v698 = vpack.c.b16 %v542, %v538
  %v699 = vpack.c.b16 %v543, %v539
  %v700 = vpack.c.b16 %v544, %v540
  %v701 = vpack.c.b16 %v549, %v545
  %v702 = vpack.c.b16 %v550, %v546
  %v703 = vpack.c.b16 %v551, %v547
  %v704 = vpack.c.b16 %v552, %v548
  %v705 = vpack.c.b16 %v557, %v553
  %v706 = vpack.c.b16 %v558, %v554
  %v707 = vpack.c.b16 %v559, %v555
  %v708 = vpack.c.b16 %v560, %v556
  %v709 = vpack.c.b16 %v565, %v561
  %v710 = vpack.c.b16 %v566, %v562
  %v711 = vpack.c.b16 %v567, %v563
  %v712 = vpack.c.b16 %v568, %v564
  %v713 = vpack.c.b16 %v573, %v569
  %v714 = vpack.c.b16 %v574, %v570
  %v715 = vpack.c.b16 %v575, %v571
  %v716 = vpack.c.b16 %v576, %v572
  %v717 = vpack.c.b16 %v581, %v577
  %v718 = vpack.c.b16 %v582, %v578
  %v719 = vpack.c.b16 %v583, %v579
  %v720 = vpack.c.b16 %v584, %v580
  %v721 = vpack.c.b16 %v589, %v585
  %v722 = vpack.c.b16 %v590, %v586
  %v723 = vpack.c.b16 %v591, %v587
  %v724 = vpack.c.b16 %v592, %v588
  %v725 = vpack.c.b16 %v597, %v593
  %v726 = vpack.c.b16 %v598, %v594
  %v727 = vpack.c.b16 %v599, %v595
  %v728 = vpack.c.b16 %v600, %v596
  %857 = vmatprep.subr.bf16.mxu0 %v630
  %858 = vmatpush1.bf16.msra.mxu0 %v629
  %859 = vmatprep.subr.bf16.mxu0 %v626
  %860 = vmatpush1.bf16.msra.mxu0 %v625
  %861 = vmatprep.subr.bf16.mxu0 %v622
  %862 = vmatpush1.bf16.msra.mxu0 %v621
  %863 = vmatprep.subr.bf16.mxu0 %v618
  %864 = vmatpush1.bf16.msra.mxu0 %v617
  %865 = vmatprep.subr.bf16.mxu0 %v614
  %866 = vmatpush1.bf16.msra.mxu0 %v613
  %867 = vmatprep.subr.bf16.mxu0 %v610
  %868 = vmatpush1.bf16.msra.mxu0 %v609
  %869 = vmatprep.subr.bf16.mxu0 %v606
  %870 = vmatpush1.bf16.msra.mxu0 %v605
  %871 = vmatprep.subr.bf16.mxu0 %v602
  %872 = vmatpush1.bf16.msra.mxu0 %v601
  %873 = vmatprep.subr.bf16.mxu0 %v662
  %874 = vmatpush2.bf16.msra.mxu0 %v661
  %875 = vmatprep.subr.bf16.mxu0 %v658
  %876 = vmatpush2.bf16.msra.mxu0 %v657
  %877 = vmatprep.subr.bf16.mxu0 %v654
  %878 = vmatpush2.bf16.msra.mxu0 %v653
  %879 = vmatprep.subr.bf16.mxu0 %v650
  %880 = vmatpush2.bf16.msra.mxu0 %v649
  %881 = vmatprep.subr.bf16.mxu0 %v646
  %882 = vmatpush2.bf16.msra.mxu0 %v645
  %883 = vmatprep.subr.bf16.mxu0 %v642
  %884 = vmatpush2.bf16.msra.mxu0 %v641
  %885 = vmatprep.subr.bf16.mxu0 %v638
  %886 = vmatpush2.bf16.msra.mxu0 %v637
  %887 = vmatprep.subr.bf16.mxu0 %v634
  %888 = vmatpush2.bf16.msra.mxu0 %v633
  %889 = vmatprep.mubr.bf16.mxu0 %v86
  %890 = vmatmul.mubr.bf16.gmra.mxu0 %v85
  %v891 = vpop.f32.mrf.mxu0
  %v892 = vadd.f32 0.0, %v891
  %v893 = vpop.f32.mrf.mxu0
  %v894 = vadd.f32 0.0, %v893
  %v895 = vpop.f32.mrf.mxu0
  %v896 = vpop.f32.mrf.mxu0
  %897 = vdwg.mxu0
  %898 = vmatprep.subr.bf16.mxu0 %v694
  %899 = vmatpush1.bf16.msra.mxu0 %v693
  %900 = vmatprep.subr.bf16.mxu0 %v690
  %901 = vmatpush1.bf16.msra.mxu0 %v689
  %902 = vmatprep.subr.bf16.mxu0 %v686
  %903 = vmatpush1.bf16.msra.mxu0 %v685
  %904 = vmatprep.subr.bf16.mxu0 %v682
  %905 = vmatpush1.bf16.msra.mxu0 %v681
  %906 = vmatprep.subr.bf16.mxu0 %v678
  %907 = vmatpush1.bf16.msra.mxu0 %v677
  %908 = vmatprep.subr.bf16.mxu0 %v674
  %909 = vmatpush1.bf16.msra.mxu0 %v673
  %910 = vmatprep.subr.bf16.mxu0 %v670
  %911 = vmatpush1.bf16.msra.mxu0 %v669
  %912 = vmatprep.subr.bf16.mxu0 %v666
  %913 = vmatpush1.bf16.msra.mxu0 %v665
  %914 = vmatprep.subr.bf16.mxu0 %v726
  %915 = vmatpush2.bf16.msra.mxu0 %v725
  %916 = vmatprep.subr.bf16.mxu0 %v722
  %917 = vmatpush2.bf16.msra.mxu0 %v721
  %918 = vmatprep.subr.bf16.mxu0 %v718
  %919 = vmatpush2.bf16.msra.mxu0 %v717
  %920 = vmatprep.subr.bf16.mxu0 %v714
  %921 = vmatpush2.bf16.msra.mxu0 %v713
  %922 = vmatprep.subr.bf16.mxu0 %v710
  %923 = vmatpush2.bf16.msra.mxu0 %v709
  %924 = vmatprep.subr.bf16.mxu0 %v706
  %925 = vmatpush2.bf16.msra.mxu0 %v705
  %926 = vmatprep.subr.bf16.mxu0 %v702
  %927 = vmatpush2.bf16.msra.mxu0 %v701
  %928 = vmatprep.subr.bf16.mxu0 %v698
  %929 = vmatpush2.bf16.msra.mxu0 %v697
  %930 = vmatprep.mubr.bf16.mxu0 %v88
  %931 = vmatmul.mubr.bf16.gmra.mxu0 %v87
  %v932 = vpop.f32.mrf.mxu0
  %v933 = vadd.f32 %v892, %v932
  %v934 = vpop.f32.mrf.mxu0
  %v935 = vadd.f32 %v894, %v934
  %v936 = vpop.f32.mrf.mxu0
  %v937 = vpop.f32.mrf.mxu0
  %938 = vdwg.mxu0
  %939 = vmatprep.subr.bf16.mxu0 %v632
  %940 = vmatpush1.bf16.msra.mxu0 %v631
  %941 = vmatprep.subr.bf16.mxu0 %v628
  %942 = vmatpush1.bf16.msra.mxu0 %v627
  %943 = vmatprep.subr.bf16.mxu0 %v624
  %944 = vmatpush1.bf16.msra.mxu0 %v623
  %945 = vmatprep.subr.bf16.mxu0 %v620
  %946 = vmatpush1.bf16.msra.mxu0 %v619
  %947 = vmatprep.subr.bf16.mxu0 %v616
  %948 = vmatpush1.bf16.msra.mxu0 %v615
  %949 = vmatprep.subr.bf16.mxu0 %v612
  %950 = vmatpush1.bf16.msra.mxu0 %v611
  %951 = vmatprep.subr.bf16.mxu0 %v608
  %952 = vmatpush1.bf16.msra.mxu0 %v607
  %953 = vmatprep.subr.bf16.mxu0 %v604
  %954 = vmatpush1.bf16.msra.mxu0 %v603
  %955 = vmatprep.subr.bf16.mxu0 %v664
  %956 = vmatpush2.bf16.msra.mxu0 %v663
  %957 = vmatprep.subr.bf16.mxu0 %v660
  %958 = vmatpush2.bf16.msra.mxu0 %v659
  %959 = vmatprep.subr.bf16.mxu0 %v656
  %960 = vmatpush2.bf16.msra.mxu0 %v655
  %961 = vmatprep.subr.bf16.mxu0 %v652
  %962 = vmatpush2.bf16.msra.mxu0 %v651
  %963 = vmatprep.subr.bf16.mxu0 %v648
  %964 = vmatpush2.bf16.msra.mxu0 %v647
  %965 = vmatprep.subr.bf16.mxu0 %v644
  %966 = vmatpush2.bf16.msra.mxu0 %v643
  %967 = vmatprep.subr.bf16.mxu0 %v640
  %968 = vmatpush2.bf16.msra.mxu0 %v639
  %969 = vmatprep.subr.bf16.mxu0 %v636
  %970 = vmatpush2.bf16.msra.mxu0 %v635
  %971 = vmatprep.mubr.bf16.mxu0 %v86
  %972 = vmatmul.mubr.bf16.gmra.mxu0 %v85
  %v973 = vpop.f32.mrf.mxu0
  %v974 = vadd.f32 0.0, %v973
  %v975 = vpop.f32.mrf.mxu0
  %v976 = vadd.f32 0.0, %v975
  %v977 = vpop.f32.mrf.mxu0
  %v978 = vpop.f32.mrf.mxu0
  %979 = vdwg.mxu0
  %980 = vmatprep.subr.bf16.mxu0 %v696
  %981 = vmatpush1.bf16.msra.mxu0 %v695
  %982 = vmatprep.subr.bf16.mxu0 %v692
  %983 = vmatpush1.bf16.msra.mxu0 %v691
  %984 = vmatprep.subr.bf16.mxu0 %v688
  %985 = vmatpush1.bf16.msra.mxu0 %v687
  %986 = vmatprep.subr.bf16.mxu0 %v684
  %987 = vmatpush1.bf16.msra.mxu0 %v683
  %988 = vmatprep.subr.bf16.mxu0 %v680
  %989 = vmatpush1.bf16.msra.mxu0 %v679
  %990 = vmatprep.subr.bf16.mxu0 %v676
  %991 = vmatpush1.bf16.msra.mxu0 %v675
  %992 = vmatprep.subr.bf16.mxu0 %v672
  %993 = vmatpush1.bf16.msra.mxu0 %v671
  %994 = vmatprep.subr.bf16.mxu0 %v668
  %995 = vmatpush1.bf16.msra.mxu0 %v667
  %996 = vmatprep.subr.bf16.mxu0 %v728
  %997 = vmatpush2.bf16.msra.mxu0 %v727
  %998 = vmatprep.subr.bf16.mxu0 %v724
  %999 = vmatpush2.bf16.msra.mxu0 %v723
  %1000 = vmatprep.subr.bf16.mxu0 %v720
  %1001 = vmatpush2.bf16.msra.mxu0 %v719
  %1002 = vmatprep.subr.bf16.mxu0 %v716
  %1003 = vmatpush2.bf16.msra.mxu0 %v715
  %1004 = vmatprep.subr.bf16.mxu0 %v712
  %1005 = vmatpush2.bf16.msra.mxu0 %v711
  %1006 = vmatprep.subr.bf16.mxu0 %v708
  %1007 = vmatpush2.bf16.msra.mxu0 %v707
  %1008 = vmatprep.subr.bf16.mxu0 %v704
  %1009 = vmatpush2.bf16.msra.mxu0 %v703
  %1010 = vmatprep.subr.bf16.mxu0 %v700
  %1011 = vmatpush2.bf16.msra.mxu0 %v699
  %1012 = vmatprep.mubr.bf16.mxu0 %v88
  %1013 = vmatmul.mubr.bf16.gmra.mxu0 %v87
  %v1014 = vpop.f32.mrf.mxu0
  %v1015 = vadd.f32 %v974, %v1014
  %v1016 = vpop.f32.mrf.mxu0
  %v1017 = vadd.f32 %v976, %v1016
  %v1018 = vpop.f32.mrf.mxu0
  %v1019 = vpop.f32.mrf.mxu0
  %1020 = vdwg.mxu0
  %v1021 = vrot.slane %v933, 4
  %v1022 = vadd.f32 %v933, %v1021
  %v1023 = vrot.slane %v1022, 2
  %v1024 = vadd.f32 %v1022, %v1023
  %v1025 = vrot.slane %v1024, 1
  %v1026 = vadd.f32 %v1024, %v1025
  %v1027 = vrot.slane %v935, 4
  %v1028 = vadd.f32 %v935, %v1027
  %v1029 = vrot.slane %v1028, 2
  %v1030 = vadd.f32 %v1028, %v1029
  %v1031 = vrot.slane %v1030, 1
  %v1032 = vadd.f32 %v1030, %v1031
  %v1033 = vrot.slane %v1015, 4
  %v1034 = vadd.f32 %v1015, %v1033
  %v1035 = vrot.slane %v1034, 2
  %v1036 = vadd.f32 %v1034, %v1035
  %v1037 = vrot.slane %v1036, 1
  %v1038 = vadd.f32 %v1036, %v1037
  %v1039 = vrot.slane %v1017, 4
  %v1040 = vadd.f32 %v1017, %v1039
  %v1041 = vrot.slane %v1040, 2
  %v1042 = vadd.f32 %v1040, %v1041
  %v1043 = vrot.slane %v1042, 1
  %v1044 = vadd.f32 %v1042, %v1043
  %v1049 = vcombine.low %v1026, %v1032
  %v1050 = vcombine.low %v1038, %v1044
  %v1052 = vunpack.c.l.s4 1966171168
  %v1053 = vunpack.c.0.s8 %v1052
  %v1054 = vlaneseq
  %v1055 = vshrl.u32 %v1054, 7
  %v1056 = vsub.s32 %v1053, %v1055
  %v1057 = vrot.slane %v1049, %v1056
  %v1059 = vunpack.c.l.s4 1966171168
  %v1060 = vunpack.c.0.s8 %v1059
  %v1061 = vlaneseq
  %v1062 = vshrl.u32 %v1061, 7
  %v1063 = vsub.s32 %v1060, %v1062
  %v1064 = vrot.slane %v1050, %v1063
  %v1065 = vcombine.low %v1057, %v1064
  %v1067 = vunpack.c.l.s4 1966171168
  %v1068 = vunpack.c.0.s8 %v1067
  %v1069 = vlaneseq
  %v1070 = vshrl.u32 %v1069, 7
  %v1071 = vsub.s32 %v1068, %v1070
  %v1072 = vrot.slane %v1065, %v1071
  %v1074 = vlaneseq
  %vm1075 = vcmp.ge.s32.totalorder %v1074, 0
  %vm1076 = vcmp.lt.s32.totalorder %v1074, 512
  %vm1077 = vmand %vm1075, %vm1076
  %1078 = vst.msk [vmem:[%s4] sm:$0xf] %vm1077, %v1072
  %v1079 = vmul.f32 %v933, %v933
  %v1080 = vmul.f32 %v935, %v935
  %v1081 = vmul.f32 %v1015, %v1015
  %v1082 = vmul.f32 %v1017, %v1017
  %v1083 = vrot.slane %v1079, 4
  %v1084 = vadd.f32 %v1079, %v1083
  %v1085 = vrot.slane %v1084, 2
  %v1086 = vadd.f32 %v1084, %v1085
  %v1087 = vrot.slane %v1086, 1
  %v1088 = vadd.f32 %v1086, %v1087
  %v1089 = vrot.slane %v1080, 4
  %v1090 = vadd.f32 %v1080, %v1089
  %v1091 = vrot.slane %v1090, 2
  %v1092 = vadd.f32 %v1090, %v1091
  %v1093 = vrot.slane %v1092, 1
  %v1094 = vadd.f32 %v1092, %v1093
  %v1095 = vrot.slane %v1081, 4
  %v1096 = vadd.f32 %v1081, %v1095
  %v1097 = vrot.slane %v1096, 2
  %v1098 = vadd.f32 %v1096, %v1097
  %v1099 = vrot.slane %v1098, 1
  %v1100 = vadd.f32 %v1098, %v1099
  %v1101 = vrot.slane %v1082, 4
  %v1102 = vadd.f32 %v1082, %v1101
  %v1103 = vrot.slane %v1102, 2
  %v1104 = vadd.f32 %v1102, %v1103
  %v1105 = vrot.slane %v1104, 1
  %v1106 = vadd.f32 %v1104, %v1105
  %v1111 = vcombine.low %v1088, %v1094
  %v1112 = vcombine.low %v1100, %v1106
  %v1114 = vunpack.c.l.s4 1966171168
  %v1115 = vunpack.c.0.s8 %v1114
  %v1116 = vlaneseq
  %v1117 = vshrl.u32 %v1116, 7
  %v1118 = vsub.s32 %v1115, %v1117
  %v1119 = vrot.slane %v1111, %v1118
  %v1121 = vunpack.c.l.s4 1966171168
  %v1122 = vunpack.c.0.s8 %v1121
  %v1123 = vlaneseq
  %v1124 = vshrl.u32 %v1123, 7
  %v1125 = vsub.s32 %v1122, %v1124
  %v1126 = vrot.slane %v1112, %v1125
  %v1127 = vcombine.low %v1119, %v1126
  %v1129 = vunpack.c.l.s4 1966171168
  %v1130 = vunpack.c.0.s8 %v1129
  %v1131 = vlaneseq
  %v1132 = vshrl.u32 %v1131, 7
  %v1133 = vsub.s32 %v1130, %v1132
  %v1134 = vrot.slane %v1127, %v1133
  %1136 = vst.msk [vmem:[%s5] sm:$0xf] %vm1077, %v1134
  // Predicated region
  $region18: #{box_discriminator_forward.2} parent=0 // pred_check
    _
  $region19: #{box_discriminator_forward.2} parent=0 // pred_check_branch
    %1138 = sbr.rel (0) target = $region21
  $region20: #{box_discriminator_forward.2} parent=0 // pred_region
    _
  $region21: #{box_discriminator_forward.2} parent=0 // pred_fallthru
    _
  // Predicated region
  $region22: #{box_discriminator_forward.2} parent=0 // pred_check
    _
  $region23: #{box_discriminator_forward.2} parent=0 // pred_check_branch
    %1140 = sbr.rel (0) target = $region25
  $region24: #{box_discriminator_forward.2} parent=0 // pred_region
    _
  $region25: #{box_discriminator_forward.2} parent=0 // pred_fallthru
    _
  // Predicated region
  $region26: #{box_discriminator_forward.2} parent=0 // pred_check
    _
  $region27: #{box_discriminator_forward.2} parent=0 // pred_check_branch
    %1142 = sbr.rel (0) target = $region29
  $region28: #{box_discriminator_forward.2} parent=0 // pred_region
    _
  $region29: #{box_discriminator_forward.2} parent=0 // pred_fallthru
    _
  // Predicated region
  $region30: #{box_discriminator_forward.2} parent=0 // pred_check
    _
  $region31: #{box_discriminator_forward.2} parent=0 // pred_check_branch
    %1144 = sbr.rel (0) target = $region33
  $region32: #{box_discriminator_forward.2} parent=0 // pred_region
    _
  $region33: #{box_discriminator_forward.2} parent=0 // pred_fallthru
    _

// kernel: box_discriminator_forward.3
$region0: #{box_discriminator_forward.3}
  #allocation0 [shape = 'u32[]', space=smem, size = 0x4, offset = 0x4, fixed_abs, tag = 'smem constant byte address 0x4 - core index']
  #allocation1 [shape = 'u32[144,128]{1,0:T(1,128)}', space=vmem, size = 0x12000, scoped, tag = 'internal scratch']
  #allocation2 [shape = 'f32[1,1]{1,0:T(1,128)S(1)}', space=vmem, size = 0x200, scoped, tag = 'scoped memory for box_discriminator_forward.3']
  %s0 = inlined_call_operand.vmem [shape: bf16[8,512], index: 0, kind: input, shape index: {}]
  %s1 = inlined_call_operand.vmem [shape: f32[1,512], index: 1, kind: input, shape index: {}]
  %s2 = inlined_call_operand.vmem [shape: f32[1,512], index: 2, kind: input, shape index: {}]
  %s3 = inlined_call_operand.vmem [shape: bf16[512,512], index: 3, kind: input, shape index: {}]
  %s4 = inlined_call_operand.vmem [shape: f32[1,512], index: 4, kind: input, shape index: {}]
  %s5 = inlined_call_operand.vmem [shape: f32[1,512], index: 5, kind: input, shape index: {}]
  %s6 = inlined_call_operand.vmem [shape: f32[1,512], index: 6, kind: input, shape index: {}]
  %s7 = inlined_call_operand.<no memory space> [shape: f32[1,1], index: 7, kind: input, shape index: {}]
  %s8 = inlined_call_operand.hbm [shape: f32[1,8], index: 8, kind: output, shape index: {}]
  %s9 = sld [smem:[#allocation0]]
  $region42: #{box_discriminator_forward.3} parent=0
    _
  %s11 = ssub.s32 1, %s9
  %s12 = scalar_select 0, %s11, %s9
  %v13 = vstv %s7
  %14 = vst [vmem:[#allocation2] sm:$0x1] %v13
  $region1: #{box_discriminator_forward.3} parent=0
    #allocation3 [shape = 'u8[512]{0}', space=vmem, size = 0x400, scoped, tag = 'output window, operand 0, single buffered']
    #allocation4 [shape = 's32[1]{0}', space=sflag, size = 0x4, scoped, tag = 'scoped memory for box_discriminator_forward.3']
    %15 = vsyncpa [#allocation4], 0
    // Predicated region
    $region2: #{box_discriminator_forward.3} parent=1 // pred_check
      _
    $region3: #{box_discriminator_forward.3} parent=1 // pred_check_branch
      %17 = sbr.rel (0) target = $region5
    $region4: #{box_discriminator_forward.3} parent=1 // pred_region
      _
    $region5: #{box_discriminator_forward.3} parent=1 // pred_fallthru
      _
    // Predicated region
    $region6: #{box_discriminator_forward.3} parent=1 // pred_check
      _
    $region7: #{box_discriminator_forward.3} parent=1 // pred_check_branch
      %19 = sbr.rel (0) target = $region9
    $region8: #{box_discriminator_forward.3} parent=1 // pred_region
      _
    $region9: #{box_discriminator_forward.3} parent=1 // pred_fallthru
      _
    // Predicated region
    $region10: #{box_discriminator_forward.3} parent=1 // pred_check
      _
    $region11: #{box_discriminator_forward.3} parent=1 // pred_check_branch
      %21 = sbr.rel (0) target = $region13
    $region12: #{box_discriminator_forward.3} parent=1 // pred_region
      _
    $region13: #{box_discriminator_forward.3} parent=1 // pred_fallthru
      _
    // Predicated region
    $region14: #{box_discriminator_forward.3} parent=1 // pred_check
      _
    $region15: #{box_discriminator_forward.3} parent=1 // pred_check_branch
      %23 = sbr.rel (0) target = $region17
    $region16: #{box_discriminator_forward.3} parent=1 // pred_region
      _
    $region17: #{box_discriminator_forward.3} parent=1 // pred_fallthru
      _
    // Predicated region
    $region18: #{box_discriminator_forward.3} parent=1 // pred_check
      _
    $region19: #{box_discriminator_forward.3} parent=1 // pred_check_branch
      %25 = sbr.rel (0) target = $region21
    $region20: #{box_discriminator_forward.3} parent=1 // pred_region
      _
    $region21: #{box_discriminator_forward.3} parent=1 // pred_fallthru
      _
    // Predicated region
    $region22: #{box_discriminator_forward.3} parent=1 // pred_check
      _
    $region23: #{box_discriminator_forward.3} parent=1 // pred_check_branch
      %27 = sbr.rel (0) target = $region25
    $region24: #{box_discriminator_forward.3} parent=1 // pred_region
      _
    $region25: #{box_discriminator_forward.3} parent=1 // pred_fallthru
      _
    // Predicated region
    $region26: #{box_discriminator_forward.3} parent=1 // pred_check
      _
    $region27: #{box_discriminator_forward.3} parent=1 // pred_check_branch
      %29 = sbr.rel (0) target = $region29
    $region28: #{box_discriminator_forward.3} parent=1 // pred_region
      _
    $region29: #{box_discriminator_forward.3} parent=1 // pred_fallthru
      _
    // Predicated region
    $region30: #{box_discriminator_forward.3} parent=1 // pred_check
      _
    $region31: #{box_discriminator_forward.3} parent=1 // pred_check_branch
      %31 = sbr.rel (0) target = $region33
    $region32: #{box_discriminator_forward.3} parent=1 // pred_region
      _
    $region33: #{box_discriminator_forward.3} parent=1 // pred_fallthru
      _
    %v32 = vld [vmem:[%s0] sm:$0xff]
    %v33 = vld [vmem:[%s0 + $0x8] sm:$0xff]
    %v34 = vunpack.c.l.bf16 %v32
    %v35 = vunpack.c.h.bf16 %v32
    %v36 = vunpack.c.l.bf16 %v33
    %v37 = vunpack.c.h.bf16 %v33
    %v38 = vld [vmem:[%s1] sm:$0xf]
    %v40 = vlaneseq
    %v41 = vshrl.u32 %v40, 7
    %v42 = vsub.s32 0, %v41
    %v43 = vrot.slane %v38, %v42
    %v44 = vlaneseq
    %v45 = vshrl.u32 %v44, 7
    %v46 = vsub.s32 1, %v45
    %v47 = vrot.slane %v38, %v46
    %v48 = vlaneseq
    %v49 = vshrl.u32 %v48, 7
    %v50 = vsub.s32 2, %v49
    %v51 = vrot.slane %v38, %v50
    %v52 = vlaneseq
    %v53 = vshrl.u32 %v52, 7
    %v54 = vsub.s32 3, %v53
    %v55 = vrot.slane %v38, %v54
    %v60 = vmul.f32 %v34, %v43
    %v61 = vmul.f32 %v35, %v47
    %v62 = vmul.f32 %v36, %v51
    %v63 = vmul.f32 %v37, %v55
    %v64 = vld [vmem:[%s2] sm:$0xf]
    %v66 = vlaneseq
    %v67 = vshrl.u32 %v66, 7
    %v68 = vsub.s32 0, %v67
    %v69 = vrot.slane %v64, %v68
    %v70 = vlaneseq
    %v71 = vshrl.u32 %v70, 7
    %v72 = vsub.s32 1, %v71
    %v73 = vrot.slane %v64, %v72
    %v74 = vlaneseq
    %v75 = vshrl.u32 %v74, 7
    %v76 = vsub.s32 2, %v75
    %v77 = vrot.slane %v64, %v76
    %v78 = vlaneseq
    %v79 = vshrl.u32 %v78, 7
    %v80 = vsub.s32 3, %v79
    %v81 = vrot.slane %v64, %v80
    %v86 = vadd.f32 %v60, %v69
    %v87 = vadd.f32 %v61, %v73
    %v88 = vadd.f32 %v62, %v77
    %v89 = vadd.f32 %v63, %v81
    %v90 = vmul.f32 %v86, 0.01
    %v91 = vmul.f32 %v87, 0.01
    %v92 = vmul.f32 %v88, 0.01
    %v93 = vmul.f32 %v89, 0.01
    %v94 = vmax.f32 %v86, %v90
    %v95 = vmax.f32 %v87, %v91
    %v96 = vmax.f32 %v88, %v92
    %v97 = vmax.f32 %v89, %v93
    %v98 = vpack.c.bf16 %v94, %v94
    %v99 = vpack.c.bf16 %v95, %v95
    %v100 = vpack.c.bf16 %v96, %v96
    %v101 = vpack.c.bf16 %v97, %v97
    %v102 = vld [vmem:[%s3] sm:$0xff]
    %v103 = vld [vmem:[%s3 + $0x8] sm:$0xff]
    %v104 = vld [vmem:[%s3 + $0x10] sm:$0xff]
    %v105 = vld [vmem:[%s3 + $0x18] sm:$0xff]
    %v106 = vld [vmem:[%s3 + $0x20] sm:$0xff]
    %v107 = vld [vmem:[%s3 + $0x28] sm:$0xff]
    %v108 = vld [vmem:[%s3 + $0x30] sm:$0xff]
    %v109 = vld [vmem:[%s3 + $0x38] sm:$0xff]
    %v110 = vld [vmem:[%s3 + $0x40] sm:$0xff]
    %v111 = vld [vmem:[%s3 + $0x48] sm:$0xff]
    %v112 = vld [vmem:[%s3 + $0x50] sm:$0xff]
    %v113 = vld [vmem:[%s3 + $0x58] sm:$0xff]
    %v114 = vld [vmem:[%s3 + $0x60] sm:$0xff]
    %v115 = vld [vmem:[%s3 + $0x68] sm:$0xff]
    %v116 = vld [vmem:[%s3 + $0x70] sm:$0xff]
    %v117 = vld [vmem:[%s3 + $0x78] sm:$0xff]
    %v118 = vld [vmem:[%s3 + $0x80] sm:$0xff]
    %v119 = vld [vmem:[%s3 + $0x88] sm:$0xff]
    %v120 = vld [vmem:[%s3 + $0x90] sm:$0xff]
    %v121 = vld [vmem:[%s3 + $0x98] sm:$0xff]
    %v122 = vld [vmem:[%s3 + $0xa0] sm:$0xff]
    %v123 = vld [vmem:[%s3 + $0xa8] sm:$0xff]
    %v124 = vld [vmem:[%s3 + $0xb0] sm:$0xff]
    %v125 = vld [vmem:[%s3 + $0xb8] sm:$0xff]
    %v126 = vld [vmem:[%s3 + $0xc0] sm:$0xff]
    %v127 = vld [vmem:[%s3 + $0xc8] sm:$0xff]
    %v128 = vld [vmem:[%s3 + $0xd0] sm:$0xff]
    %v129 = vld [vmem:[%s3 + $0xd8] sm:$0xff]
    %v130 = vld [vmem:[%s3 + $0xe0] sm:$0xff]
    %v131 = vld [vmem:[%s3 + $0xe8] sm:$0xff]
    %v132 = vld [vmem:[%s3 + $0xf0] sm:$0xff]
    %v133 = vld [vmem:[%s3 + $0xf8] sm:$0xff]
    %v134 = vld [vmem:[%s3 + $0x100] sm:$0xff]
    %v135 = vld [vmem:[%s3 + $0x108] sm:$0xff]
    %v136 = vld [vmem:[%s3 + $0x110] sm:$0xff]
    %v137 = vld [vmem:[%s3 + $0x118] sm:$0xff]
    %v138 = vld [vmem:[%s3 + $0x120] sm:$0xff]
    %v139 = vld [vmem:[%s3 + $0x128] sm:$0xff]
    %v140 = vld [vmem:[%s3 + $0x130] sm:$0xff]
    %v141 = vld [vmem:[%s3 + $0x138] sm:$0xff]
    %v142 = vld [vmem:[%s3 + $0x140] sm:$0xff]
    %v143 = vld [vmem:[%s3 + $0x148] sm:$0xff]
    %v144 = vld [vmem:[%s3 + $0x150] sm:$0xff]
    %v145 = vld [vmem:[%s3 + $0x158] sm:$0xff]
    %v146 = vld [vmem:[%s3 + $0x160] sm:$0xff]
    %v147 = vld [vmem:[%s3 + $0x168] sm:$0xff]
    %v148 = vld [vmem:[%s3 + $0x170] sm:$0xff]
    %v149 = vld [vmem:[%s3 + $0x178] sm:$0xff]
    %v150 = vld [vmem:[%s3 + $0x180] sm:$0xff]
    %v151 = vld [vmem:[%s3 + $0x188] sm:$0xff]
    %v152 = vld [vmem:[%s3 + $0x190] sm:$0xff]
    %v153 = vld [vmem:[%s3 + $0x198] sm:$0xff]
    %v154 = vld [vmem:[%s3 + $0x1a0] sm:$0xff]
    %v155 = vld [vmem:[%s3 + $0x1a8] sm:$0xff]
    %v156 = vld [vmem:[%s3 + $0x1b0] sm:$0xff]
    %v157 = vld [vmem:[%s3 + $0x1b8] sm:$0xff]
    %v158 = vld [vmem:[%s3 + $0x1c0] sm:$0xff]
    %v159 = vld [vmem:[%s3 + $0x1c8] sm:$0xff]
    %v160 = vld [vmem:[%s3 + $0x1d0] sm:$0xff]
    %v161 = vld [vmem:[%s3 + $0x1d8] sm:$0xff]
    %v162 = vld [vmem:[%s3 + $0x1e0] sm:$0xff]
    %v163 = vld [vmem:[%s3 + $0x1e8] sm:$0xff]
    %v164 = vld [vmem:[%s3 + $0x1f0] sm:$0xff]
    %v165 = vld [vmem:[%s3 + $0x1f8] sm:$0xff]
    %v166 = vld [vmem:[%s3 + $0x200] sm:$0xff]
    %v167 = vld [vmem:[%s3 + $0x208] sm:$0xff]
    %v168 = vld [vmem:[%s3 + $0x210] sm:$0xff]
    %v169 = vld [vmem:[%s3 + $0x218] sm:$0xff]
    %v170 = vld [vmem:[%s3 + $0x220] sm:$0xff]
    %v171 = vld [vmem:[%s3 + $0x228] sm:$0xff]
    %v172 = vld [vmem:[%s3 + $0x230] sm:$0xff]
    %v173 = vld [vmem:[%s3 + $0x238] sm:$0xff]
    %v174 = vld [vmem:[%s3 + $0x240] sm:$0xff]
    %v175 = vld [vmem:[%s3 + $0x248] sm:$0xff]
    %v176 = vld [vmem:[%s3 + $0x250] sm:$0xff]
    %v177 = vld [vmem:[%s3 + $0x258] sm:$0xff]
    %v178 = vld [vmem:[%s3 + $0x260] sm:$0xff]
    %v179 = vld [vmem:[%s3 + $0x268] sm:$0xff]
    %v180 = vld [vmem:[%s3 + $0x270] sm:$0xff]
    %v181 = vld [vmem:[%s3 + $0x278] sm:$0xff]
    %v182 = vld [vmem:[%s3 + $0x280] sm:$0xff]
    %v183 = vld [vmem:[%s3 + $0x288] sm:$0xff]
    %v184 = vld [vmem:[%s3 + $0x290] sm:$0xff]
    %v185 = vld [vmem:[%s3 + $0x298] sm:$0xff]
    %v186 = vld [vmem:[%s3 + $0x2a0] sm:$0xff]
    %v187 = vld [vmem:[%s3 + $0x2a8] sm:$0xff]
    %v188 = vld [vmem:[%s3 + $0x2b0] sm:$0xff]
    %v189 = vld [vmem:[%s3 + $0x2b8] sm:$0xff]
    %v190 = vld [vmem:[%s3 + $0x2c0] sm:$0xff]
    %v191 = vld [vmem:[%s3 + $0x2c8] sm:$0xff]
    %v192 = vld [vmem:[%s3 + $0x2d0] sm:$0xff]
    %v193 = vld [vmem:[%s3 + $0x2d8] sm:$0xff]
    %v194 = vld [vmem:[%s3 + $0x2e0] sm:$0xff]
    %v195 = vld [vmem:[%s3 + $0x2e8] sm:$0xff]
    %v196 = vld [vmem:[%s3 + $0x2f0] sm:$0xff]
    %v197 = vld [vmem:[%s3 + $0x2f8] sm:$0xff]
    %v198 = vld [vmem:[%s3 + $0x300] sm:$0xff]
    %v199 = vld [vmem:[%s3 + $0x308] sm:$0xff]
    %v200 = vld [vmem:[%s3 + $0x310] sm:$0xff]
    %v201 = vld [vmem:[%s3 + $0x318] sm:$0xff]
    %v202 = vld [vmem:[%s3 + $0x320] sm:$0xff]
    %v203 = vld [vmem:[%s3 + $0x328] sm:$0xff]
    %v204 = vld [vmem:[%s3 + $0x330] sm:$0xff]
    %v205 = vld [vmem:[%s3 + $0x338] sm:$0xff]
    %v206 = vld [vmem:[%s3 + $0x340] sm:$0xff]
    %v207 = vld [vmem:[%s3 + $0x348] sm:$0xff]
    %v208 = vld [vmem:[%s3 + $0x350] sm:$0xff]
    %v209 = vld [vmem:[%s3 + $0x358] sm:$0xff]
    %v210 = vld [vmem:[%s3 + $0x360] sm:$0xff]
    %v211 = vld [vmem:[%s3 + $0x368] sm:$0xff]
    %v212 = vld [vmem:[%s3 + $0x370] sm:$0xff]
    %v213 = vld [vmem:[%s3 + $0x378] sm:$0xff]
    %v214 = vld [vmem:[%s3 + $0x380] sm:$0xff]
    %v215 = vld [vmem:[%s3 + $0x388] sm:$0xff]
    %v216 = vld [vmem:[%s3 + $0x390] sm:$0xff]
    %v217 = vld [vmem:[%s3 + $0x398] sm:$0xff]
    %v218 = vld [vmem:[%s3 + $0x3a0] sm:$0xff]
    %v219 = vld [vmem:[%s3 + $0x3a8] sm:$0xff]
    %v220 = vld [vmem:[%s3 + $0x3b0] sm:$0xff]
    %v221 = vld [vmem:[%s3 + $0x3b8] sm:$0xff]
    %v222 = vld [vmem:[%s3 + $0x3c0] sm:$0xff]
    %v223 = vld [vmem:[%s3 + $0x3c8] sm:$0xff]
    %v224 = vld [vmem:[%s3 + $0x3d0] sm:$0xff]
    %v225 = vld [vmem:[%s3 + $0x3d8] sm:$0xff]
    %v226 = vld [vmem:[%s3 + $0x3e0] sm:$0xff]
    %v227 = vld [vmem:[%s3 + $0x3e8] sm:$0xff]
    %v228 = vld [vmem:[%s3 + $0x3f0] sm:$0xff]
    %v229 = vld [vmem:[%s3 + $0x3f8] sm:$0xff]
    %v358 = vunpack.c.l.b16 %v102
    %v359 = vunpack.c.h.b16 %v102
    %v360 = vunpack.c.l.b16 %v103
    %v361 = vunpack.c.h.b16 %v103
    %v362 = vunpack.c.l.b16 %v104
    %v363 = vunpack.c.h.b16 %v104
    %v364 = vunpack.c.l.b16 %v105
    %v365 = vunpack.c.h.b16 %v105
    %v366 = vunpack.c.l.b16 %v106
    %v367 = vunpack.c.h.b16 %v106
    %v368 = vunpack.c.l.b16 %v107
    %v369 = vunpack.c.h.b16 %v107
    %v370 = vunpack.c.l.b16 %v108
    %v371 = vunpack.c.h.b16 %v108
    %v372 = vunpack.c.l.b16 %v109
    %v373 = vunpack.c.h.b16 %v109
    %v374 = vunpack.c.l.b16 %v110
    %v375 = vunpack.c.h.b16 %v110
    %v376 = vunpack.c.l.b16 %v111
    %v377 = vunpack.c.h.b16 %v111
    %v378 = vunpack.c.l.b16 %v112
    %v379 = vunpack.c.h.b16 %v112
    %v380 = vunpack.c.l.b16 %v113
    %v381 = vunpack.c.h.b16 %v113
    %v382 = vunpack.c.l.b16 %v114
    %v383 = vunpack.c.h.b16 %v114
    %v384 = vunpack.c.l.b16 %v115
    %v385 = vunpack.c.h.b16 %v115
    %v386 = vunpack.c.l.b16 %v116
    %v387 = vunpack.c.h.b16 %v116
    %v388 = vunpack.c.l.b16 %v117
    %v389 = vunpack.c.h.b16 %v117
    %v390 = vunpack.c.l.b16 %v118
    %v391 = vunpack.c.h.b16 %v118
    %v392 = vunpack.c.l.b16 %v119
    %v393 = vunpack.c.h.b16 %v119
    %v394 = vunpack.c.l.b16 %v120
    %v395 = vunpack.c.h.b16 %v120
    %v396 = vunpack.c.l.b16 %v121
    %v397 = vunpack.c.h.b16 %v121
    %v398 = vunpack.c.l.b16 %v122
    %v399 = vunpack.c.h.b16 %v122
    %v400 = vunpack.c.l.b16 %v123
    %v401 = vunpack.c.h.b16 %v123
    %v402 = vunpack.c.l.b16 %v124
    %v403 = vunpack.c.h.b16 %v124
    %v404 = vunpack.c.l.b16 %v125
    %v405 = vunpack.c.h.b16 %v125
    %v406 = vunpack.c.l.b16 %v126
    %v407 = vunpack.c.h.b16 %v126
    %v408 = vunpack.c.l.b16 %v127
    %v409 = vunpack.c.h.b16 %v127
    %v410 = vunpack.c.l.b16 %v128
    %v411 = vunpack.c.h.b16 %v128
    %v412 = vunpack.c.l.b16 %v129
    %v413 = vunpack.c.h.b16 %v129
    %v414 = vunpack.c.l.b16 %v130
    %v415 = vunpack.c.h.b16 %v130
    %v416 = vunpack.c.l.b16 %v131
    %v417 = vunpack.c.h.b16 %v131
    %v418 = vunpack.c.l.b16 %v132
    %v419 = vunpack.c.h.b16 %v132
    %v420 = vunpack.c.l.b16 %v133
    %v421 = vunpack.c.h.b16 %v133
    %v422 = vunpack.c.l.b16 %v134
    %v423 = vunpack.c.h.b16 %v134
    %v424 = vunpack.c.l.b16 %v135
    %v425 = vunpack.c.h.b16 %v135
    %v426 = vunpack.c.l.b16 %v136
    %v427 = vunpack.c.h.b16 %v136
    %v428 = vunpack.c.l.b16 %v137
    %v429 = vunpack.c.h.b16 %v137
    %v430 = vunpack.c.l.b16 %v138
    %v431 = vunpack.c.h.b16 %v138
    %v432 = vunpack.c.l.b16 %v139
    %v433 = vunpack.c.h.b16 %v139
    %v434 = vunpack.c.l.b16 %v140
    %v435 = vunpack.c.h.b16 %v140
    %v436 = vunpack.c.l.b16 %v141
    %v437 = vunpack.c.h.b16 %v141
    %v438 = vunpack.c.l.b16 %v142
    %v439 = vunpack.c.h.b16 %v142
    %v440 = vunpack.c.l.b16 %v143
    %v441 = vunpack.c.h.b16 %v143
    %v442 = vunpack.c.l.b16 %v144
    %v443 = vunpack.c.h.b16 %v144
    %v444 = vunpack.c.l.b16 %v145
    %v445 = vunpack.c.h.b16 %v145
    %v446 = vunpack.c.l.b16 %v146
    %v447 = vunpack.c.h.b16 %v146
    %v448 = vunpack.c.l.b16 %v147
    %v449 = vunpack.c.h.b16 %v147
    %v450 = vunpack.c.l.b16 %v148
    %v451 = vunpack.c.h.b16 %v148
    %v452 = vunpack.c.l.b16 %v149
    %v453 = vunpack.c.h.b16 %v149
    %v454 = vunpack.c.l.b16 %v150
    %v455 = vunpack.c.h.b16 %v150
    %v456 = vunpack.c.l.b16 %v151
    %v457 = vunpack.c.h.b16 %v151
    %v458 = vunpack.c.l.b16 %v152
    %v459 = vunpack.c.h.b16 %v152
    %v460 = vunpack.c.l.b16 %v153
    %v461 = vunpack.c.h.b16 %v153
    %v462 = vunpack.c.l.b16 %v154
    %v463 = vunpack.c.h.b16 %v154
    %v464 = vunpack.c.l.b16 %v155
    %v465 = vunpack.c.h.b16 %v155
    %v466 = vunpack.c.l.b16 %v156
    %v467 = vunpack.c.h.b16 %v156
    %v468 = vunpack.c.l.b16 %v157
    %v469 = vunpack.c.h.b16 %v157
    %v470 = vunpack.c.l.b16 %v158
    %v471 = vunpack.c.h.b16 %v158
    %v472 = vunpack.c.l.b16 %v159
    %v473 = vunpack.c.h.b16 %v159
    %v474 = vunpack.c.l.b16 %v160
    %v475 = vunpack.c.h.b16 %v160
    %v476 = vunpack.c.l.b16 %v161
    %v477 = vunpack.c.h.b16 %v161
    %v478 = vunpack.c.l.b16 %v162
    %v479 = vunpack.c.h.b16 %v162
    %v480 = vunpack.c.l.b16 %v163
    %v481 = vunpack.c.h.b16 %v163
    %v482 = vunpack.c.l.b16 %v164
    %v483 = vunpack.c.h.b16 %v164
    %v484 = vunpack.c.l.b16 %v165
    %v485 = vunpack.c.h.b16 %v165
    %v486 = vunpack.c.l.b16 %v166
    %v487 = vunpack.c.h.b16 %v166
    %v488 = vunpack.c.l.b16 %v167
    %v489 = vunpack.c.h.b16 %v167
    %v490 = vunpack.c.l.b16 %v168
    %v491 = vunpack.c.h.b16 %v168
    %v492 = vunpack.c.l.b16 %v169
    %v493 = vunpack.c.h.b16 %v169
    %v494 = vunpack.c.l.b16 %v170
    %v495 = vunpack.c.h.b16 %v170
    %v496 = vunpack.c.l.b16 %v171
    %v497 = vunpack.c.h.b16 %v171
    %v498 = vunpack.c.l.b16 %v172
    %v499 = vunpack.c.h.b16 %v172
    %v500 = vunpack.c.l.b16 %v173
    %v501 = vunpack.c.h.b16 %v173
    %v502 = vunpack.c.l.b16 %v174
    %v503 = vunpack.c.h.b16 %v174
    %v504 = vunpack.c.l.b16 %v175
    %v505 = vunpack.c.h.b16 %v175
    %v506 = vunpack.c.l.b16 %v176
    %v507 = vunpack.c.h.b16 %v176
    %v508 = vunpack.c.l.b16 %v177
    %v509 = vunpack.c.h.b16 %v177
    %v510 = vunpack.c.l.b16 %v178
    %v511 = vunpack.c.h.b16 %v178
    %v512 = vunpack.c.l.b16 %v179
    %v513 = vunpack.c.h.b16 %v179
    %v514 = vunpack.c.l.b16 %v180
    %v515 = vunpack.c.h.b16 %v180
    %v516 = vunpack.c.l.b16 %v181
    %v517 = vunpack.c.h.b16 %v181
    %v518 = vunpack.c.l.b16 %v182
    %v519 = vunpack.c.h.b16 %v182
    %v520 = vunpack.c.l.b16 %v183
    %v521 = vunpack.c.h.b16 %v183
    %v522 = vunpack.c.l.b16 %v184
    %v523 = vunpack.c.h.b16 %v184
    %v524 = vunpack.c.l.b16 %v185
    %v525 = vunpack.c.h.b16 %v185
    %v526 = vunpack.c.l.b16 %v186
    %v527 = vunpack.c.h.b16 %v186
    %v528 = vunpack.c.l.b16 %v187
    %v529 = vunpack.c.h.b16 %v187
    %v530 = vunpack.c.l.b16 %v188
    %v531 = vunpack.c.h.b16 %v188
    %v532 = vunpack.c.l.b16 %v189
    %v533 = vunpack.c.h.b16 %v189
    %v534 = vunpack.c.l.b16 %v190
    %v535 = vunpack.c.h.b16 %v190
    %v536 = vunpack.c.l.b16 %v191
    %v537 = vunpack.c.h.b16 %v191
    %v538 = vunpack.c.l.b16 %v192
    %v539 = vunpack.c.h.b16 %v192
    %v540 = vunpack.c.l.b16 %v193
    %v541 = vunpack.c.h.b16 %v193
    %v542 = vunpack.c.l.b16 %v194
    %v543 = vunpack.c.h.b16 %v194
    %v544 = vunpack.c.l.b16 %v195
    %v545 = vunpack.c.h.b16 %v195
    %v546 = vunpack.c.l.b16 %v196
    %v547 = vunpack.c.h.b16 %v196
    %v548 = vunpack.c.l.b16 %v197
    %v549 = vunpack.c.h.b16 %v197
    %v550 = vunpack.c.l.b16 %v198
    %v551 = vunpack.c.h.b16 %v198
    %v552 = vunpack.c.l.b16 %v199
    %v553 = vunpack.c.h.b16 %v199
    %v554 = vunpack.c.l.b16 %v200
    %v555 = vunpack.c.h.b16 %v200
    %v556 = vunpack.c.l.b16 %v201
    %v557 = vunpack.c.h.b16 %v201
    %v558 = vunpack.c.l.b16 %v202
    %v559 = vunpack.c.h.b16 %v202
    %v560 = vunpack.c.l.b16 %v203
    %v561 = vunpack.c.h.b16 %v203
    %v562 = vunpack.c.l.b16 %v204
    %v563 = vunpack.c.h.b16 %v204
    %v564 = vunpack.c.l.b16 %v205
    %v565 = vunpack.c.h.b16 %v205
    %v566 = vunpack.c.l.b16 %v206
    %v567 = vunpack.c.h.b16 %v206
    %v568 = vunpack.c.l.b16 %v207
    %v569 = vunpack.c.h.b16 %v207
    %v570 = vunpack.c.l.b16 %v208
    %v571 = vunpack.c.h.b16 %v208
    %v572 = vunpack.c.l.b16 %v209
    %v573 = vunpack.c.h.b16 %v209
    %v574 = vunpack.c.l.b16 %v210
    %v575 = vunpack.c.h.b16 %v210
    %v576 = vunpack.c.l.b16 %v211
    %v577 = vunpack.c.h.b16 %v211
    %v578 = vunpack.c.l.b16 %v212
    %v579 = vunpack.c.h.b16 %v212
    %v580 = vunpack.c.l.b16 %v213
    %v581 = vunpack.c.h.b16 %v213
    %v582 = vunpack.c.l.b16 %v214
    %v583 = vunpack.c.h.b16 %v214
    %v584 = vunpack.c.l.b16 %v215
    %v585 = vunpack.c.h.b16 %v215
    %v586 = vunpack.c.l.b16 %v216
    %v587 = vunpack.c.h.b16 %v216
    %v588 = vunpack.c.l.b16 %v217
    %v589 = vunpack.c.h.b16 %v217
    %v590 = vunpack.c.l.b16 %v218
    %v591 = vunpack.c.h.b16 %v218
    %v592 = vunpack.c.l.b16 %v219
    %v593 = vunpack.c.h.b16 %v219
    %v594 = vunpack.c.l.b16 %v220
    %v595 = vunpack.c.h.b16 %v220
    %v596 = vunpack.c.l.b16 %v221
    %v597 = vunpack.c.h.b16 %v221
    %v598 = vunpack.c.l.b16 %v222
    %v599 = vunpack.c.h.b16 %v222
    %v600 = vunpack.c.l.b16 %v223
    %v601 = vunpack.c.h.b16 %v223
    %v602 = vunpack.c.l.b16 %v224
    %v603 = vunpack.c.h.b16 %v224
    %v604 = vunpack.c.l.b16 %v225
    %v605 = vunpack.c.h.b16 %v225
    %v606 = vunpack.c.l.b16 %v226
    %v607 = vunpack.c.h.b16 %v226
    %v608 = vunpack.c.l.b16 %v227
    %v609 = vunpack.c.h.b16 %v227
    %v610 = vunpack.c.l.b16 %v228
    %v611 = vunpack.c.h.b16 %v228
    %v612 = vunpack.c.l.b16 %v229
    %v613 = vunpack.c.h.b16 %v229
    %v614 = vpack.c.b16 %v362, %v358
    %v615 = vpack.c.b16 %v363, %v359
    %v616 = vpack.c.b16 %v364, %v360
    %v617 = vpack.c.b16 %v365, %v361
    %v618 = vpack.c.b16 %v370, %v366
    %v619 = vpack.c.b16 %v371, %v367
    %v620 = vpack.c.b16 %v372, %v368
    %v621 = vpack.c.b16 %v373, %v369
    %v622 = vpack.c.b16 %v378, %v374
    %v623 = vpack.c.b16 %v379, %v375
    %v624 = vpack.c.b16 %v380, %v376
    %v625 = vpack.c.b16 %v381, %v377
    %v626 = vpack.c.b16 %v386, %v382
    %v627 = vpack.c.b16 %v387, %v383
    %v628 = vpack.c.b16 %v388, %v384
    %v629 = vpack.c.b16 %v389, %v385
    %v630 = vpack.c.b16 %v394, %v390
    %v631 = vpack.c.b16 %v395, %v391
    %v632 = vpack.c.b16 %v396, %v392
    %v633 = vpack.c.b16 %v397, %v393
    %v634 = vpack.c.b16 %v402, %v398
    %v635 = vpack.c.b16 %v403, %v399
    %v636 = vpack.c.b16 %v404, %v400
    %v637 = vpack.c.b16 %v405, %v401
    %v638 = vpack.c.b16 %v410, %v406
    %v639 = vpack.c.b16 %v411, %v407
    %v640 = vpack.c.b16 %v412, %v408
    %v641 = vpack.c.b16 %v413, %v409
    %v642 = vpack.c.b16 %v418, %v414
    %v643 = vpack.c.b16 %v419, %v415
    %v644 = vpack.c.b16 %v420, %v416
    %v645 = vpack.c.b16 %v421, %v417
    %v646 = vpack.c.b16 %v426, %v422
    %v647 = vpack.c.b16 %v427, %v423
    %v648 = vpack.c.b16 %v428, %v424
    %v649 = vpack.c.b16 %v429, %v425
    %v650 = vpack.c.b16 %v434, %v430
    %v651 = vpack.c.b16 %v435, %v431
    %v652 = vpack.c.b16 %v436, %v432
    %v653 = vpack.c.b16 %v437, %v433
    %v654 = vpack.c.b16 %v442, %v438
    %v655 = vpack.c.b16 %v443, %v439
    %v656 = vpack.c.b16 %v444, %v440
    %v657 = vpack.c.b16 %v445, %v441
    %v658 = vpack.c.b16 %v450, %v446
    %v659 = vpack.c.b16 %v451, %v447
    %v660 = vpack.c.b16 %v452, %v448
    %v661 = vpack.c.b16 %v453, %v449
    %v662 = vpack.c.b16 %v458, %v454
    %v663 = vpack.c.b16 %v459, %v455
    %v664 = vpack.c.b16 %v460, %v456
    %v665 = vpack.c.b16 %v461, %v457
    %v666 = vpack.c.b16 %v466, %v462
    %v667 = vpack.c.b16 %v467, %v463
    %v668 = vpack.c.b16 %v468, %v464
    %v669 = vpack.c.b16 %v469, %v465
    %v670 = vpack.c.b16 %v474, %v470
    %v671 = vpack.c.b16 %v475, %v471
    %v672 = vpack.c.b16 %v476, %v472
    %v673 = vpack.c.b16 %v477, %v473
    %v674 = vpack.c.b16 %v482, %v478
    %v675 = vpack.c.b16 %v483, %v479
    %v676 = vpack.c.b16 %v484, %v480
    %v677 = vpack.c.b16 %v485, %v481
    %v678 = vpack.c.b16 %v490, %v486
    %v679 = vpack.c.b16 %v491, %v487
    %v680 = vpack.c.b16 %v492, %v488
    %v681 = vpack.c.b16 %v493, %v489
    %v682 = vpack.c.b16 %v498, %v494
    %v683 = vpack.c.b16 %v499, %v495
    %v684 = vpack.c.b16 %v500, %v496
    %v685 = vpack.c.b16 %v501, %v497
    %v686 = vpack.c.b16 %v506, %v502
    %v687 = vpack.c.b16 %v507, %v503
    %v688 = vpack.c.b16 %v508, %v504
    %v689 = vpack.c.b16 %v509, %v505
    %v690 = vpack.c.b16 %v514, %v510
    %v691 = vpack.c.b16 %v515, %v511
    %v692 = vpack.c.b16 %v516, %v512
    %v693 = vpack.c.b16 %v517, %v513
    %v694 = vpack.c.b16 %v522, %v518
    %v695 = vpack.c.b16 %v523, %v519
    %v696 = vpack.c.b16 %v524, %v520
    %v697 = vpack.c.b16 %v525, %v521
    %v698 = vpack.c.b16 %v530, %v526
    %v699 = vpack.c.b16 %v531, %v527
    %v700 = vpack.c.b16 %v532, %v528
    %v701 = vpack.c.b16 %v533, %v529
    %v702 = vpack.c.b16 %v538, %v534
    %v703 = vpack.c.b16 %v539, %v535
    %v704 = vpack.c.b16 %v540, %v536
    %v705 = vpack.c.b16 %v541, %v537
    %v706 = vpack.c.b16 %v546, %v542
    %v707 = vpack.c.b16 %v547, %v543
    %v708 = vpack.c.b16 %v548, %v544
    %v709 = vpack.c.b16 %v549, %v545
    %v710 = vpack.c.b16 %v554, %v550
    %v711 = vpack.c.b16 %v555, %v551
    %v712 = vpack.c.b16 %v556, %v552
    %v713 = vpack.c.b16 %v557, %v553
    %v714 = vpack.c.b16 %v562, %v558
    %v715 = vpack.c.b16 %v563, %v559
    %v716 = vpack.c.b16 %v564, %v560
    %v717 = vpack.c.b16 %v565, %v561
    %v718 = vpack.c.b16 %v570, %v566
    %v719 = vpack.c.b16 %v571, %v567
    %v720 = vpack.c.b16 %v572, %v568
    %v721 = vpack.c.b16 %v573, %v569
    %v722 = vpack.c.b16 %v578, %v574
    %v723 = vpack.c.b16 %v579, %v575
    %v724 = vpack.c.b16 %v580, %v576
    %v725 = vpack.c.b16 %v581, %v577
    %v726 = vpack.c.b16 %v586, %v582
    %v727 = vpack.c.b16 %v587, %v583
    %v728 = vpack.c.b16 %v588, %v584
    %v729 = vpack.c.b16 %v589, %v585
    %v730 = vpack.c.b16 %v594, %v590
    %v731 = vpack.c.b16 %v595, %v591
    %v732 = vpack.c.b16 %v596, %v592
    %v733 = vpack.c.b16 %v597, %v593
    %v734 = vpack.c.b16 %v602, %v598
    %v735 = vpack.c.b16 %v603, %v599
    %v736 = vpack.c.b16 %v604, %v600
    %v737 = vpack.c.b16 %v605, %v601
    %v738 = vpack.c.b16 %v610, %v606
    %v739 = vpack.c.b16 %v611, %v607
    %v740 = vpack.c.b16 %v612, %v608
    %v741 = vpack.c.b16 %v613, %v609
    %870 = vmatprep.subr.bf16.mxu0 %v643
    %871 = vmatpush1.bf16.msra.mxu0 %v642
    %872 = vmatprep.subr.bf16.mxu0 %v639
    %873 = vmatpush1.bf16.msra.mxu0 %v638
    %874 = vmatprep.subr.bf16.mxu0 %v635
    %875 = vmatpush1.bf16.msra.mxu0 %v634
    %876 = vmatprep.subr.bf16.mxu0 %v631
    %877 = vmatpush1.bf16.msra.mxu0 %v630
    %878 = vmatprep.subr.bf16.mxu0 %v627
    %879 = vmatpush1.bf16.msra.mxu0 %v626
    %880 = vmatprep.subr.bf16.mxu0 %v623
    %881 = vmatpush1.bf16.msra.mxu0 %v622
    %882 = vmatprep.subr.bf16.mxu0 %v619
    %883 = vmatpush1.bf16.msra.mxu0 %v618
    %884 = vmatprep.subr.bf16.mxu0 %v615
    %885 = vmatpush1.bf16.msra.mxu0 %v614
    %886 = vmatprep.subr.bf16.mxu0 %v675
    %887 = vmatpush2.bf16.msra.mxu0 %v674
    %888 = vmatprep.subr.bf16.mxu0 %v671
    %889 = vmatpush2.bf16.msra.mxu0 %v670
    %890 = vmatprep.subr.bf16.mxu0 %v667
    %891 = vmatpush2.bf16.msra.mxu0 %v666
    %892 = vmatprep.subr.bf16.mxu0 %v663
    %893 = vmatpush2.bf16.msra.mxu0 %v662
    %894 = vmatprep.subr.bf16.mxu0 %v659
    %895 = vmatpush2.bf16.msra.mxu0 %v658
    %896 = vmatprep.subr.bf16.mxu0 %v655
    %897 = vmatpush2.bf16.msra.mxu0 %v654
    %898 = vmatprep.subr.bf16.mxu0 %v651
    %899 = vmatpush2.bf16.msra.mxu0 %v650
    %900 = vmatprep.subr.bf16.mxu0 %v647
    %901 = vmatpush2.bf16.msra.mxu0 %v646
    %902 = vmatprep.mubr.bf16.mxu0 %v99
    %903 = vmatmul.mubr.bf16.gmra.mxu0 %v98
    %v904 = vpop.f32.mrf.mxu0
    %v905 = vadd.f32 0.0, %v904
    %v906 = vpop.f32.mrf.mxu0
    %v907 = vadd.f32 0.0, %v906
    %v908 = vpop.f32.mrf.mxu0
    %v909 = vpop.f32.mrf.mxu0
    %910 = vdwg.mxu0
    %911 = vmatprep.subr.bf16.mxu0 %v707
    %912 = vmatpush1.bf16.msra.mxu0 %v706
    %913 = vmatprep.subr.bf16.mxu0 %v703
    %914 = vmatpush1.bf16.msra.mxu0 %v702
    %915 = vmatprep.subr.bf16.mxu0 %v699
    %916 = vmatpush1.bf16.msra.mxu0 %v698
    %917 = vmatprep.subr.bf16.mxu0 %v695
    %918 = vmatpush1.bf16.msra.mxu0 %v694
    %919 = vmatprep.subr.bf16.mxu0 %v691
    %920 = vmatpush1.bf16.msra.mxu0 %v690
    %921 = vmatprep.subr.bf16.mxu0 %v687
    %922 = vmatpush1.bf16.msra.mxu0 %v686
    %923 = vmatprep.subr.bf16.mxu0 %v683
    %924 = vmatpush1.bf16.msra.mxu0 %v682
    %925 = vmatprep.subr.bf16.mxu0 %v679
    %926 = vmatpush1.bf16.msra.mxu0 %v678
    %927 = vmatprep.subr.bf16.mxu0 %v739
    %928 = vmatpush2.bf16.msra.mxu0 %v738
    %929 = vmatprep.subr.bf16.mxu0 %v735
    %930 = vmatpush2.bf16.msra.mxu0 %v734
    %931 = vmatprep.subr.bf16.mxu0 %v731
    %932 = vmatpush2.bf16.msra.mxu0 %v730
    %933 = vmatprep.subr.bf16.mxu0 %v727
    %934 = vmatpush2.bf16.msra.mxu0 %v726
    %935 = vmatprep.subr.bf16.mxu0 %v723
    %936 = vmatpush2.bf16.msra.mxu0 %v722
    %937 = vmatprep.subr.bf16.mxu0 %v719
    %938 = vmatpush2.bf16.msra.mxu0 %v718
    %939 = vmatprep.subr.bf16.mxu0 %v715
    %940 = vmatpush2.bf16.msra.mxu0 %v714
    %941 = vmatprep.subr.bf16.mxu0 %v711
    %942 = vmatpush2.bf16.msra.mxu0 %v710
    %943 = vmatprep.mubr.bf16.mxu0 %v101
    %944 = vmatmul.mubr.bf16.gmra.mxu0 %v100
    %v945 = vpop.f32.mrf.mxu0
    %v946 = vadd.f32 %v905, %v945
    %v947 = vpop.f32.mrf.mxu0
    %v948 = vadd.f32 %v907, %v947
    %v949 = vpop.f32.mrf.mxu0
    %v950 = vpop.f32.mrf.mxu0
    %951 = vdwg.mxu0
    %952 = vmatprep.subr.bf16.mxu0 %v645
    %953 = vmatpush1.bf16.msra.mxu0 %v644
    %954 = vmatprep.subr.bf16.mxu0 %v641
    %955 = vmatpush1.bf16.msra.mxu0 %v640
    %956 = vmatprep.subr.bf16.mxu0 %v637
    %957 = vmatpush1.bf16.msra.mxu0 %v636
    %958 = vmatprep.subr.bf16.mxu0 %v633
    %959 = vmatpush1.bf16.msra.mxu0 %v632
    %960 = vmatprep.subr.bf16.mxu0 %v629
    %961 = vmatpush1.bf16.msra.mxu0 %v628
    %962 = vmatprep.subr.bf16.mxu0 %v625
    %963 = vmatpush1.bf16.msra.mxu0 %v624
    %964 = vmatprep.subr.bf16.mxu0 %v621
    %965 = vmatpush1.bf16.msra.mxu0 %v620
    %966 = vmatprep.subr.bf16.mxu0 %v617
    %967 = vmatpush1.bf16.msra.mxu0 %v616
    %968 = vmatprep.subr.bf16.mxu0 %v677
    %969 = vmatpush2.bf16.msra.mxu0 %v676
    %970 = vmatprep.subr.bf16.mxu0 %v673
    %971 = vmatpush2.bf16.msra.mxu0 %v672
    %972 = vmatprep.subr.bf16.mxu0 %v669
    %973 = vmatpush2.bf16.msra.mxu0 %v668
    %974 = vmatprep.subr.bf16.mxu0 %v665
    %975 = vmatpush2.bf16.msra.mxu0 %v664
    %976 = vmatprep.subr.bf16.mxu0 %v661
    %977 = vmatpush2.bf16.msra.mxu0 %v660
    %978 = vmatprep.subr.bf16.mxu0 %v657
    %979 = vmatpush2.bf16.msra.mxu0 %v656
    %980 = vmatprep.subr.bf16.mxu0 %v653
    %981 = vmatpush2.bf16.msra.mxu0 %v652
    %982 = vmatprep.subr.bf16.mxu0 %v649
    %983 = vmatpush2.bf16.msra.mxu0 %v648
    %984 = vmatprep.mubr.bf16.mxu0 %v99
    %985 = vmatmul.mubr.bf16.gmra.mxu0 %v98
    %v986 = vpop.f32.mrf.mxu0
    %v987 = vadd.f32 0.0, %v986
    %v988 = vpop.f32.mrf.mxu0
    %v989 = vadd.f32 0.0, %v988
    %v990 = vpop.f32.mrf.mxu0
    %v991 = vpop.f32.mrf.mxu0
    %992 = vdwg.mxu0
    %993 = vmatprep.subr.bf16.mxu0 %v709
    %994 = vmatpush1.bf16.msra.mxu0 %v708
    %995 = vmatprep.subr.bf16.mxu0 %v705
    %996 = vmatpush1.bf16.msra.mxu0 %v704
    %997 = vmatprep.subr.bf16.mxu0 %v701
    %998 = vmatpush1.bf16.msra.mxu0 %v700
    %999 = vmatprep.subr.bf16.mxu0 %v697
    %1000 = vmatpush1.bf16.msra.mxu0 %v696
    %1001 = vmatprep.subr.bf16.mxu0 %v693
    %1002 = vmatpush1.bf16.msra.mxu0 %v692
    %1003 = vmatprep.subr.bf16.mxu0 %v689
    %1004 = vmatpush1.bf16.msra.mxu0 %v688
    %1005 = vmatprep.subr.bf16.mxu0 %v685
    %1006 = vmatpush1.bf16.msra.mxu0 %v684
    %1007 = vmatprep.subr.bf16.mxu0 %v681
    %1008 = vmatpush1.bf16.msra.mxu0 %v680
    %1009 = vmatprep.subr.bf16.mxu0 %v741
    %1010 = vmatpush2.bf16.msra.mxu0 %v740
    %1011 = vmatprep.subr.bf16.mxu0 %v737
    %1012 = vmatpush2.bf16.msra.mxu0 %v736
    %1013 = vmatprep.subr.bf16.mxu0 %v733
    %1014 = vmatpush2.bf16.msra.mxu0 %v732
    %1015 = vmatprep.subr.bf16.mxu0 %v729
    %1016 = vmatpush2.bf16.msra.mxu0 %v728
    %1017 = vmatprep.subr.bf16.mxu0 %v725
    %1018 = vmatpush2.bf16.msra.mxu0 %v724
    %1019 = vmatprep.subr.bf16.mxu0 %v721
    %1020 = vmatpush2.bf16.msra.mxu0 %v720
    %1021 = vmatprep.subr.bf16.mxu0 %v717
    %1022 = vmatpush2.bf16.msra.mxu0 %v716
    %1023 = vmatprep.subr.bf16.mxu0 %v713
    %1024 = vmatpush2.bf16.msra.mxu0 %v712
    %1025 = vmatprep.mubr.bf16.mxu0 %v101
    %1026 = vmatmul.mubr.bf16.gmra.mxu0 %v100
    %v1027 = vpop.f32.mrf.mxu0
    %v1028 = vadd.f32 %v987, %v1027
    %v1029 = vpop.f32.mrf.mxu0
    %v1030 = vadd.f32 %v989, %v1029
    %v1031 = vpop.f32.mrf.mxu0
    %v1032 = vpop.f32.mrf.mxu0
    %1033 = vdwg.mxu0
    %v1034 = vld [vmem:[%s4] sm:$0xf]
    %v1036 = vlaneseq
    %v1037 = vshrl.u32 %v1036, 7
    %v1038 = vsub.s32 0, %v1037
    %v1039 = vrot.slane %v1034, %v1038
    %v1040 = vlaneseq
    %v1041 = vshrl.u32 %v1040, 7
    %v1042 = vsub.s32 1, %v1041
    %v1043 = vrot.slane %v1034, %v1042
    %v1044 = vlaneseq
    %v1045 = vshrl.u32 %v1044, 7
    %v1046 = vsub.s32 2, %v1045
    %v1047 = vrot.slane %v1034, %v1046
    %v1048 = vlaneseq
    %v1049 = vshrl.u32 %v1048, 7
    %v1050 = vsub.s32 3, %v1049
    %v1051 = vrot.slane %v1034, %v1050
    %v1056 = vmul.f32 %v946, %v1039
    %v1057 = vmul.f32 %v948, %v1043
    %v1058 = vmul.f32 %v1028, %v1047
    %v1059 = vmul.f32 %v1030, %v1051
    %v1060 = vld [vmem:[%s5] sm:$0xf]
    %v1062 = vlaneseq
    %v1063 = vshrl.u32 %v1062, 7
    %v1064 = vsub.s32 0, %v1063
    %v1065 = vrot.slane %v1060, %v1064
    %v1066 = vlaneseq
    %v1067 = vshrl.u32 %v1066, 7
    %v1068 = vsub.s32 1, %v1067
    %v1069 = vrot.slane %v1060, %v1068
    %v1070 = vlaneseq
    %v1071 = vshrl.u32 %v1070, 7
    %v1072 = vsub.s32 2, %v1071
    %v1073 = vrot.slane %v1060, %v1072
    %v1074 = vlaneseq
    %v1075 = vshrl.u32 %v1074, 7
    %v1076 = vsub.s32 3, %v1075
    %v1077 = vrot.slane %v1060, %v1076
    %v1082 = vadd.f32 %v1056, %v1065
    %v1083 = vadd.f32 %v1057, %v1069
    %v1084 = vadd.f32 %v1058, %v1073
    %v1085 = vadd.f32 %v1059, %v1077
    %v1086 = vmul.f32 %v1082, 0.01
    %v1087 = vmul.f32 %v1083, 0.01
    %v1088 = vmul.f32 %v1084, 0.01
    %v1089 = vmul.f32 %v1085, 0.01
    %v1090 = vmax.f32 %v1082, %v1086
    %v1091 = vmax.f32 %v1083, %v1087
    %v1092 = vmax.f32 %v1084, %v1088
    %v1093 = vmax.f32 %v1085, %v1089
    %v1094 = vld [vmem:[%s6] sm:$0xf]
    %v1095 = vld [vmem:[#allocation2] sm:$0x1]
    %1097 = vset.pattern.permute.xlu0 0
    %1098 = vperm.xlu0 %1097, %v1095
    %v1099 = vpop.permute.xlu0 %1098
    %v1101 = vlaneseq
    %v1102 = vshrl.u32 %v1101, 7
    %v1103 = vsub.s32 0, %v1102
    %v1104 = vrot.slane %v1099, %v1103
    %v1106 = vlaneseq
    %v1107 = vshrl.u32 %v1106, 7
    %v1108 = vsub.s32 0, %v1107
    %v1109 = vrot.slane %v1094, %v1108
    %v1110 = vlaneseq
    %v1111 = vshrl.u32 %v1110, 7
    %v1112 = vsub.s32 1, %v1111
    %v1113 = vrot.slane %v1094, %v1112
    %v1114 = vlaneseq
    %v1115 = vshrl.u32 %v1114, 7
    %v1116 = vsub.s32 2, %v1115
    %v1117 = vrot.slane %v1094, %v1116
    %v1118 = vlaneseq
    %v1119 = vshrl.u32 %v1118, 7
    %v1120 = vsub.s32 3, %v1119
    %v1121 = vrot.slane %v1094, %v1120
    %1126 = vmatprep.subr.mxu0 0.0
    %1127 = vmatpush1.xpose.msra.mxu0 0.0
    %1128 = vmatprep.subr.mxu0 0.0
    %1129 = vmatpush1.xpose.msra.mxu0 0.0
    %1130 = vmatprep.subr.mxu0 0.0
    %1131 = vmatpush1.xpose.msra.mxu0 0.0
    %1132 = vmatprep.subr.mxu0 0.0
    %1133 = vmatpush1.xpose.msra.mxu0 0.0
    %1134 = vmatprep.subr.mxu0 0.0
    %1135 = vmatpush1.xpose.msra.mxu0 0.0
    %1136 = vmatprep.subr.mxu0 0.0
    %1137 = vmatpush1.xpose.msra.mxu0 0.0
    %1138 = vmatprep.subr.mxu0 0.0
    %1139 = vmatpush1.xpose.msra.mxu0 0.0
    %1140 = vmatprep.subr.mxu0 0.0
    %1141 = vmatpush1.xpose.msra.mxu0 0.0
    %1142 = vmatprep.subr.mxu0 0.0
    %1143 = vmatpush1.xpose.msra.mxu0 0.0
    %1144 = vmatprep.subr.mxu0 0.0
    %1145 = vmatpush1.xpose.msra.mxu0 0.0
    %1146 = vmatprep.subr.mxu0 0.0
    %1147 = vmatpush1.xpose.msra.mxu0 0.0
    %1148 = vmatprep.subr.mxu0 0.0
    %1149 = vmatpush1.xpose.msra.mxu0 0.0
    %1150 = vmatprep.subr.mxu0 0.0
    %1151 = vmatpush1.xpose.msra.mxu0 0.0
    %1152 = vmatprep.subr.mxu0 0.0
    %1153 = vmatpush1.xpose.msra.mxu0 0.0
    %1154 = vmatprep.subr.mxu0 0.0
    %1155 = vmatpush1.xpose.msra.mxu0 0.0
    %1156 = vmatprep.subr.mxu0 %v1091
    %1157 = vmatpush1.xpose.msra.mxu0 %v1090
    %1158 = vmatprep.subr.mxu0 0.0
    %1159 = vmatpush2.xpose.msra.mxu0 0.0
    %1160 = vmatprep.subr.mxu0 0.0
    %1161 = vmatpush2.xpose.msra.mxu0 0.0
    %1162 = vmatprep.subr.mxu0 0.0
    %1163 = vmatpush2.xpose.msra.mxu0 0.0
    %1164 = vmatprep.subr.mxu0 0.0
    %1165 = vmatpush2.xpose.msra.mxu0 0.0
    %1166 = vmatprep.subr.mxu0 0.0
    %1167 = vmatpush2.xpose.msra.mxu0 0.0
    %1168 = vmatprep.subr.mxu0 0.0
    %1169 = vmatpush2.xpose.msra.mxu0 0.0
    %1170 = vmatprep.subr.mxu0 0.0
    %1171 = vmatpush2.xpose.msra.mxu0 0.0
    %1172 = vmatprep.subr.mxu0 0.0
    %1173 = vmatpush2.xpose.msra.mxu0 0.0
    %1174 = vmatprep.subr.mxu0 0.0
    %1175 = vmatpush2.xpose.msra.mxu0 0.0
    %1176 = vmatprep.subr.mxu0 0.0
    %1177 = vmatpush2.xpose.msra.mxu0 0.0
    %1178 = vmatprep.subr.mxu0 0.0
    %1179 = vmatpush2.xpose.msra.mxu0 0.0
    %1180 = vmatprep.subr.mxu0 0.0
    %1181 = vmatpush2.xpose.msra.mxu0 0.0
    %1182 = vmatprep.subr.mxu0 0.0
    %1183 = vmatpush2.xpose.msra.mxu0 0.0
    %1184 = vmatprep.subr.mxu0 0.0
    %1185 = vmatpush2.xpose.msra.mxu0 0.0
    %1186 = vmatprep.subr.mxu0 0.0
    %1187 = vmatpush2.xpose.msra.mxu0 0.0
    %1188 = vmatprep.subr.mxu0 0.0
    %1189 = vmatpush2.xpose.msra.mxu0 0.0
    %1190 = vmatprep.mubr.f32.mxu0 %v1113
    %1191 = vmatmul.mubr.f32.gmra.mxu0 %v1109
    %v1192 = vpop.f32.mrf.mxu0
    %v1193 = vadd.f32 %v1104, %v1192
    %v1194 = vpop.f32.mrf.mxu0
    %1195 = vdwg.mxu0
    %1196 = vmatprep.subr.mxu0 0.0
    %1197 = vmatpush1.xpose.msra.mxu0 0.0
    %1198 = vmatprep.subr.mxu0 0.0
    %1199 = vmatpush1.xpose.msra.mxu0 0.0
    %1200 = vmatprep.subr.mxu0 0.0
    %1201 = vmatpush1.xpose.msra.mxu0 0.0
    %1202 = vmatprep.subr.mxu0 0.0
    %1203 = vmatpush1.xpose.msra.mxu0 0.0
    %1204 = vmatprep.subr.mxu0 0.0
    %1205 = vmatpush1.xpose.msra.mxu0 0.0
    %1206 = vmatprep.subr.mxu0 0.0
    %1207 = vmatpush1.xpose.msra.mxu0 0.0
    %1208 = vmatprep.subr.mxu0 0.0
    %1209 = vmatpush1.xpose.msra.mxu0 0.0
    %1210 = vmatprep.subr.mxu0 0.0
    %1211 = vmatpush1.xpose.msra.mxu0 0.0
    %1212 = vmatprep.subr.mxu0 0.0
    %1213 = vmatpush1.xpose.msra.mxu0 0.0
    %1214 = vmatprep.subr.mxu0 0.0
    %1215 = vmatpush1.xpose.msra.mxu0 0.0
    %1216 = vmatprep.subr.mxu0 0.0
    %1217 = vmatpush1.xpose.msra.mxu0 0.0
    %1218 = vmatprep.subr.mxu0 0.0
    %1219 = vmatpush1.xpose.msra.mxu0 0.0
    %1220 = vmatprep.subr.mxu0 0.0
    %1221 = vmatpush1.xpose.msra.mxu0 0.0
    %1222 = vmatprep.subr.mxu0 0.0
    %1223 = vmatpush1.xpose.msra.mxu0 0.0
    %1224 = vmatprep.subr.mxu0 0.0
    %1225 = vmatpush1.xpose.msra.mxu0 0.0
    %1226 = vmatprep.subr.mxu0 %v1093
    %1227 = vmatpush1.xpose.msra.mxu0 %v1092
    %1228 = vmatprep.subr.mxu0 0.0
    %1229 = vmatpush2.xpose.msra.mxu0 0.0
    %1230 = vmatprep.subr.mxu0 0.0
    %1231 = vmatpush2.xpose.msra.mxu0 0.0
    %1232 = vmatprep.subr.mxu0 0.0
    %1233 = vmatpush2.xpose.msra.mxu0 0.0
    %1234 = vmatprep.subr.mxu0 0.0
    %1235 = vmatpush2.xpose.msra.mxu0 0.0
    %1236 = vmatprep.subr.mxu0 0.0
    %1237 = vmatpush2.xpose.msra.mxu0 0.0
    %1238 = vmatprep.subr.mxu0 0.0
    %1239 = vmatpush2.xpose.msra.mxu0 0.0
    %1240 = vmatprep.subr.mxu0 0.0
    %1241 = vmatpush2.xpose.msra.mxu0 0.0
    %1242 = vmatprep.subr.mxu0 0.0
    %1243 = vmatpush2.xpose.msra.mxu0 0.0
    %1244 = vmatprep.subr.mxu0 0.0
    %1245 = vmatpush2.xpose.msra.mxu0 0.0
    %1246 = vmatprep.subr.mxu0 0.0
    %1247 = vmatpush2.xpose.msra.mxu0 0.0
    %1248 = vmatprep.subr.mxu0 0.0
    %1249 = vmatpush2.xpose.msra.mxu0 0.0
    %1250 = vmatprep.subr.mxu0 0.0
    %1251 = vmatpush2.xpose.msra.mxu0 0.0
    %1252 = vmatprep.subr.mxu0 0.0
    %1253 = vmatpush2.xpose.msra.mxu0 0.0
    %1254 = vmatprep.subr.mxu0 0.0
    %1255 = vmatpush2.xpose.msra.mxu0 0.0
    %1256 = vmatprep.subr.mxu0 0.0
    %1257 = vmatpush2.xpose.msra.mxu0 0.0
    %1258 = vmatprep.subr.mxu0 0.0
    %1259 = vmatpush2.xpose.msra.mxu0 0.0
    %1260 = vmatprep.mubr.f32.mxu0 %v1121
    %1261 = vmatmul.mubr.f32.gmra.mxu0 %v1117
    %v1262 = vpop.f32.mrf.mxu0
    %v1263 = vadd.f32 %v1193, %v1262
    %v1264 = vpop.f32.mrf.mxu0
    %1265 = vdwg.mxu0
    %v1266 = vxor.u32 %v1263, 2147483648
    %v1267 = vmul.f32 %v1266, 1.442695
    %v1268 = vpow.pop %v1267
    %v1269 = vadd.f32 %v1268, 1.0
    %v1270 = vrcp.pop %v1269
    %v1271 = vmul.f32 1.0, %v1270
    %vm1272 = vcmask 57344
    %1273 = vst.msk [vmem:[#allocation3] sm:$0x1] %vm1272, %v1271
    // Predicated region
    $region34: #{box_discriminator_forward.3} parent=1 // pred_check
      _
    $region35: #{box_discriminator_forward.3} parent=1 // pred_check_branch
      %1275 = sbr.rel (0) target = $region37
    $region36: #{box_discriminator_forward.3} parent=1 // pred_region
      %s1277 = ssub.s32 16, 16
      %1278 = vsyncadd [#allocation4], %s1277
      %s1280 = sshll.u32 [#allocation3], 4
      %s1281 = int_to_ptr.vmem [resolvable:$true] %s1280
      %1283 = dma.vmem_to_hbm [thread:$0]  %s1281, 16, %s8, [#allocation4]
    $region37: #{box_discriminator_forward.3} parent=1 // pred_fallthru
      _
    // Predicated region
    $region38: #{box_discriminator_forward.3} parent=1 // pred_check
      _
    $region39: #{box_discriminator_forward.3} parent=1 // pred_check_branch
      %1285 = sbr.rel (0) target = $region41
    $region40: #{box_discriminator_forward.3} parent=1 // pred_region
      %1286 = dma.done [#allocation4], 16
    $region41: #{box_discriminator_forward.3} parent=1 // pred_fallthru
      _
    %1287 = vsyncpa [#allocation4], 1

</llo_original>
